<compile_context>
chip_gen: v5e
topology: v5e:2x2
jax: 0.10.0
libtpu: 0.0.40
codegen_flags: <defaults>
</compile_context>

<pallas_src>
import functools

import jax
import jax.numpy as jnp
from jax.experimental import pallas as pl
from jax.experimental.pallas import tpu as pltpu

_SUBLANE = 8     # f32 sublane tile
_LANE = 128      # lane tile


def _round_up(n, m):
    return -(-n // m) * m


# ----------------------------------------------------------------------------
# Fused kernel: both LSTM layers + classifier in a single grid step.
# ----------------------------------------------------------------------------
def _fused_lstm_classifier_kernel(*refs, num_layers, batch_pad, seq_len, hidden):
    x_ref = refs[0]                                   # (T*BP, D)  time-major slab
    layer_refs = refs[1:1 + 3 * num_layers]           # (wih, whh, bias) per layer
    wout_ref, bout_ref, out_ref = refs[1 + 3 * num_layers:]

    BP, T, H = batch_pad, seq_len, hidden             # 4*H == packed gate width

    seq2d = x_ref[...]                                # (T*BP, D) float32

    h = None
    for layer in range(num_layers):
        wih = layer_refs[3 * layer + 0][...]          # (in_dim, 4H)
        whh = layer_refs[3 * layer + 1][...]          # (H, 4H)   VMEM-resident
        b = layer_refs[3 * layer + 2][...]            # (1, 4H)

        # Hoisted input projection (+ bias) for ALL timesteps: one MXU matmul.
        xproj = jnp.dot(seq2d, wih, preferred_element_type=jnp.float32) + b   # (T*BP, 4H)

        h = jnp.zeros((BP, H), jnp.float32)
        c = jnp.zeros((BP, H), jnp.float32)
        outs = []
        # Fully unrolled recurrence (T=8): only h @ W_hh is on the serial path.
        for t in range(T):
            gates = xproj[t * BP:(t + 1) * BP, :] + jnp.dot(
                h, whh, preferred_element_type=jnp.float32)                   # (BP, 4H)
            # One sigmoid + one tanh pass over the whole packed gate tile, then
            # pick per-gate lanes (PyTorch gate order i, f, g, o).
            sig = jax.nn.sigmoid(gates)
            th = jnp.tanh(gates)
            i_g = sig[:, 0 * H:1 * H]
            f_g = sig[:, 1 * H:2 * H]
            g_g = th[:, 2 * H:3 * H]
            o_g = sig[:, 3 * H:4 * H]
            c = f_g * c + i_g * g_g
            h = o_g * jnp.tanh(c)
            outs.append(h)

        if layer + 1 < num_layers:
            # Next layer consumes this layer's hidden sequence (t-major slab).
            seq2d = jnp.concatenate(outs, axis=0)                             # (T*BP, H)

    # Classifier on the last timestep of the last layer; lane-dense (BP, 128) store.
    out_ref[...] = (
        jnp.dot(h, wout_ref[...], preferred_element_type=jnp.float32) + bout_ref[...]
    )


# ----------------------------------------------------------------------------
# Parameter construction (PyTorch-shaped) + kernel-layout packing.
# ----------------------------------------------------------------------------
def init_params(key, input_size, hidden_size, output_size, num_layers):
    """Raw parameters in (transposed) PyTorch layout: W^T and combined bias."""
    params = {"lstm": []}
    stdv = 1.0 / jnp.sqrt(jnp.float32(hidden_size))
    for layer in range(num_layers):
        in_dim = input_size if layer == 0 else hidden_size
        key, k1, k2, k3, k4 = jax.random.split(key, 5)
        w_ih = jax.random.uniform(k1, (4 * hidden_size, in_dim), jnp.float32, -stdv, stdv)
        w_hh = jax.random.uniform(k2, (4 * hidden_size, hidden_size), jnp.float32, -stdv, stdv)
        b_ih = jax.random.uniform(k3, (4 * hidden_size,), jnp.float32, -stdv, stdv)
        b_hh = jax.random.uniform(k4, (4 * hidden_size,), jnp.float32, -stdv, stdv)
        params["lstm"].append(
            (w_ih.T, w_hh.T, (b_ih + b_hh).reshape(1, 4 * hidden_size))
        )
    key, k5, k6 = jax.random.split(key, 3)
    w_out = jax.random.uniform(k5, (output_size, hidden_size), jnp.float32, -stdv, stdv)
    b_out = jax.random.uniform(k6, (output_size,), jnp.float32, -stdv, stdv)
    params["w_out_t"] = w_out.T
    params["b_out"] = b_out.reshape(1, output_size)
    return params


def prepare_kernel_params(params, hidden_size, output_size):
    """Packed-gate layout (W^T already is), pad only the classifier to 128 lanes."""
    H = hidden_size
    O = output_size
    OP = _round_up(O, _LANE)

    tensors = []
    for (w_ih_t, w_hh_t, bias) in params["lstm"]:
        # Gates stay packed in one contiguous 4*H lane block (PyTorch order i,f,g,o).
        tensors += [w_ih_t.astype(jnp.float32),
                    w_hh_t.astype(jnp.float32),
                    bias.astype(jnp.float32)]

    wout_p = jnp.zeros((H, OP), jnp.float32).at[:, :O].set(params["w_out_t"])
    bout_p = jnp.zeros((1, OP), jnp.float32).at[:, :O].set(params["b_out"])
    tensors += [wout_p, bout_p]

    return {"tensors": tuple(tensors),
            "num_layers": len(params["lstm"]),
            "hidden": H,
            "out_size": O}


# ----------------------------------------------------------------------------
# Forward wrapper: pad batch, build time-major slab, launch fused kernel, slice.
# ----------------------------------------------------------------------------
def lstm_classifier_forward(x_btd, kparams):
    tensors = kparams["tensors"]
    num_layers = kparams["num_layers"]
    hidden = kparams["hidden"]
    out_size = kparams["out_size"]

    B, T, D = x_btd.shape
    BP = _round_up(max(B, _SUBLANE), _SUBLANE)
    OP = tensors[-1].shape[-1]

    # Time-major padded slab built in the wrapper (fuses into the pad); each
    # timestep occupies an aligned BP-row sublane group inside the kernel.
    x_tm = jnp.zeros((T, BP, D), jnp.float32).at[:, :B, :].set(
        jnp.transpose(x_btd.astype(jnp.float32), (1, 0, 2)))
    x_tm = x_tm.reshape(T * BP, D)

    kernel = functools.partial(_fused_lstm_classifier_kernel,
                               num_layers=num_layers, batch_pad=BP,
                               seq_len=T, hidden=hidden)

    in_specs = [pl.BlockSpec((T * BP, D), lambda i: (0, 0))]
    in_specs += [pl.BlockSpec(p.shape, lambda i: (0, 0)) for p in tensors]

    out_pad = pl.pallas_call(
        kernel,
        out_shape=jax.ShapeDtypeStruct((BP, OP), jnp.float32),
        grid=(1,),
        in_specs=in_specs,
        out_specs=pl.BlockSpec((BP, OP), lambda i: (0, 0)),
        compiler_params=pltpu.CompilerParams(
            dimension_semantics=("arbitrary",),
        ),
    )(x_tm, *tensors)

    return out_pad[:B, :out_size]


# ----------------------------------------------------------------------------
# Pure-JAX reference (unpadded, PyTorch semantics) for correctness check.
# ----------------------------------------------------------------------------
def reference_forward(x_btd, params):
    h_seq = jnp.transpose(x_btd, (1, 0, 2)).astype(jnp.float32)
    for (w_ih_t, w_hh_t, bias) in params["lstm"]:
        T, B, _ = h_seq.shape
        H = w_hh_t.shape[0]
        h = jnp.zeros((B, H), jnp.float32)
        c = jnp.zeros((B, H), jnp.float32)
        outs = []
        for t in range(T):
            gates = h_seq[t] @ w_ih_t + h @ w_hh_t + bias
            i = jax.nn.sigmoid(gates[:, 0 * H:1 * H])
            f = jax.nn.sigmoid(gates[:, 1 * H:2 * H])
            g = jnp.tanh(gates[:, 2 * H:3 * H])
            o = jax.nn.sigmoid(gates[:, 3 * H:4 * H])
            c = f * c + i * g
            h = o * jnp.tanh(c)
            outs.append(h)
        h_seq = jnp.stack(outs, axis=0)
    return h_seq[-1] @ params["w_out_t"] + params["b_out"]


if __name__ == "__main__":
    INPUT_SIZE = 16
    HIDDEN_SIZE = 32     # 4*H = 128: all four gates pack into one lane tile
    OUTPUT_SIZE = 4
    NUM_LAYERS = 2
    BATCH = 2
    SEQ = 8

    key = jax.random.PRNGKey(0)
    key_x, key_p = jax.random.split(key)
    x = jax.random.normal(key_x, (BATCH, SEQ, INPUT_SIZE), jnp.float32)

    raw_params = init_params(key_p, INPUT_SIZE, HIDDEN_SIZE, OUTPUT_SIZE, NUM_LAYERS)
    kparams = prepare_kernel_params(raw_params, HIDDEN_SIZE, OUTPUT_SIZE)

    out = jax.block_until_ready(lstm_classifier_forward(x, kparams))
    ref = reference_forward(x, raw_params)

    assert out.shape == (BATCH, OUTPUT_SIZE)
    assert jnp.allclose(out, ref, atol=1e-4, rtol=1e-4), "mismatch vs reference"

    print("KERNEL_OK")
</pallas_src>

<mosaic_0001>
module attributes {stable_mosaic.version = 11 : i64} {
  func.func @_fused_lstm_classifier_kernel(%arg0: i32, %arg1: memref<64x16xf32, #tpu.memory_space<vmem>>, %arg2: memref<16x128xf32, #tpu.memory_space<vmem>>, %arg3: memref<32x128xf32, #tpu.memory_space<vmem>>, %arg4: memref<1x128xf32, #tpu.memory_space<vmem>>, %arg5: memref<32x128xf32, #tpu.memory_space<vmem>>, %arg6: memref<32x128xf32, #tpu.memory_space<vmem>>, %arg7: memref<1x128xf32, #tpu.memory_space<vmem>>, %arg8: memref<32x128xf32, #tpu.memory_space<vmem>>, %arg9: memref<1x128xf32, #tpu.memory_space<vmem>>, %arg10: memref<8x128xf32, #tpu.memory_space<vmem>>) attributes {dimension_semantics = [#tpu.dimension_semantics<arbitrary>], iteration_bounds = array<i64: 1>, scalar_prefetch = 0 : i64, scratch_operands = 0 : i64, tpu.core_type = #tpu.core_type<tc>, window_params = [{pipeline_mode = #tpu.pipeline_mode<synchronous>, transform_indices = @transform_0, window_bounds = array<i64: 64, 16>}, {pipeline_mode = #tpu.pipeline_mode<synchronous>, transform_indices = @transform_1, window_bounds = array<i64: 16, 128>}, {pipeline_mode = #tpu.pipeline_mode<synchronous>, transform_indices = @transform_2, window_bounds = array<i64: 32, 128>}, {pipeline_mode = #tpu.pipeline_mode<synchronous>, transform_indices = @transform_3, window_bounds = array<i64: 1, 128>}, {pipeline_mode = #tpu.pipeline_mode<synchronous>, transform_indices = @transform_4, window_bounds = array<i64: 32, 128>}, {pipeline_mode = #tpu.pipeline_mode<synchronous>, transform_indices = @transform_5, window_bounds = array<i64: 32, 128>}, {pipeline_mode = #tpu.pipeline_mode<synchronous>, transform_indices = @transform_6, window_bounds = array<i64: 1, 128>}, {pipeline_mode = #tpu.pipeline_mode<synchronous>, transform_indices = @transform_7, window_bounds = array<i64: 32, 128>}, {pipeline_mode = #tpu.pipeline_mode<synchronous>, transform_indices = @transform_8, window_bounds = array<i64: 1, 128>}, {pipeline_mode = #tpu.pipeline_mode<synchronous>, transform_indices = @transform_9, window_bounds = array<i64: 8, 128>}]} {
    %c0 = arith.constant 0 : index
    %c0_0 = arith.constant 0 : index
    %0 = vector.load %arg1[%c0, %c0_0] : memref<64x16xf32, #tpu.memory_space<vmem>>, vector<64x16xf32>
    %c0_1 = arith.constant 0 : index
    %c0_2 = arith.constant 0 : index
    %1 = vector.load %arg2[%c0_1, %c0_2] : memref<16x128xf32, #tpu.memory_space<vmem>>, vector<16x128xf32>
    %c0_3 = arith.constant 0 : index
    %c0_4 = arith.constant 0 : index
    %2 = vector.load %arg3[%c0_3, %c0_4] : memref<32x128xf32, #tpu.memory_space<vmem>>, vector<32x128xf32>
    %c0_5 = arith.constant 0 : index
    %c0_6 = arith.constant 0 : index
    %3 = vector.load %arg4[%c0_5, %c0_6] : memref<1x128xf32, #tpu.memory_space<vmem>>, vector<1x128xf32>
    %cst = arith.constant dense<0.000000e+00> : vector<64x128xf32>
    %4 = tpu.matmul %0, %1, %cst {dimension_numbers = #tpu.dot_dimension_numbers<[1], [0], [0], [1], [0, 0, 1, 1], [], []>} : vector<64x16xf32>, vector<16x128xf32>, vector<64x128xf32> -> vector<64x128xf32>
    %5 = vector.broadcast %3 : vector<1x128xf32> to vector<64x128xf32>
    %6 = arith.addf %4, %5 : vector<64x128xf32>
    %cst_7 = arith.constant 0.000000e+00 : f32
    %7 = vector.broadcast %cst_7 : f32 to vector<8x32xf32>
    %cst_8 = arith.constant 0.000000e+00 : f32
    %8 = vector.broadcast %cst_8 : f32 to vector<8x32xf32>
    %9 = vector.extract_strided_slice %6 {offsets = [0, 0], sizes = [8, 128], strides = [1, 1]} : vector<64x128xf32> to vector<8x128xf32>
    %cst_9 = arith.constant dense<0.000000e+00> : vector<8x128xf32>
    %10 = tpu.matmul %7, %2, %cst_9 {dimension_numbers = #tpu.dot_dimension_numbers<[1], [0], [0], [1], [0, 0, 1, 1], [], []>} : vector<8x32xf32>, vector<32x128xf32>, vector<8x128xf32> -> vector<8x128xf32>
    %11 = arith.addf %9, %10 : vector<8x128xf32>
    %12 = arith.negf %11 : vector<8x128xf32>
    %13 = math.exp %12 : vector<8x128xf32>
    %cst_10 = arith.constant 1.000000e+00 : f32
    %14 = vector.broadcast %cst_10 : f32 to vector<8x128xf32>
    %15 = arith.addf %14, %13 : vector<8x128xf32>
    %16 = arith.divf %14, %15 : vector<8x128xf32>
    %17 = math.tanh %11 : vector<8x128xf32>
    %18 = vector.extract_strided_slice %16 {offsets = [0, 0], sizes = [8, 32], strides = [1, 1]} : vector<8x128xf32> to vector<8x32xf32>
    %19 = vector.extract_strided_slice %16 {offsets = [0, 32], sizes = [8, 32], strides = [1, 1]} : vector<8x128xf32> to vector<8x32xf32>
    %20 = vector.extract_strided_slice %17 {offsets = [0, 64], sizes = [8, 32], strides = [1, 1]} : vector<8x128xf32> to vector<8x32xf32>
    %21 = vector.extract_strided_slice %16 {offsets = [0, 96], sizes = [8, 32], strides = [1, 1]} : vector<8x128xf32> to vector<8x32xf32>
    %22 = arith.mulf %19, %8 : vector<8x32xf32>
    %23 = arith.mulf %18, %20 : vector<8x32xf32>
    %24 = arith.addf %22, %23 : vector<8x32xf32>
    %25 = math.tanh %24 : vector<8x32xf32>
    %26 = arith.mulf %21, %25 : vector<8x32xf32>
    %27 = vector.extract_strided_slice %6 {offsets = [8, 0], sizes = [8, 128], strides = [1, 1]} : vector<64x128xf32> to vector<8x128xf32>
    %cst_11 = arith.constant dense<0.000000e+00> : vector<8x128xf32>
    %28 = tpu.matmul %26, %2, %cst_11 {dimension_numbers = #tpu.dot_dimension_numbers<[1], [0], [0], [1], [0, 0, 1, 1], [], []>} : vector<8x32xf32>, vector<32x128xf32>, vector<8x128xf32> -> vector<8x128xf32>
    %29 = arith.addf %27, %28 : vector<8x128xf32>
    %30 = arith.negf %29 : vector<8x128xf32>
    %31 = math.exp %30 : vector<8x128xf32>
    %cst_12 = arith.constant 1.000000e+00 : f32
    %32 = vector.broadcast %cst_12 : f32 to vector<8x128xf32>
    %33 = arith.addf %32, %31 : vector<8x128xf32>
    %34 = arith.divf %32, %33 : vector<8x128xf32>
    %35 = math.tanh %29 : vector<8x128xf32>
    %36 = vector.extract_strided_slice %34 {offsets = [0, 0], sizes = [8, 32], strides = [1, 1]} : vector<8x128xf32> to vector<8x32xf32>
    %37 = vector.extract_strided_slice %34 {offsets = [0, 32], sizes = [8, 32], strides = [1, 1]} : vector<8x128xf32> to vector<8x32xf32>
    %38 = vector.extract_strided_slice %35 {offsets = [0, 64], sizes = [8, 32], strides = [1, 1]} : vector<8x128xf32> to vector<8x32xf32>
    %39 = vector.extract_strided_slice %34 {offsets = [0, 96], sizes = [8, 32], strides = [1, 1]} : vector<8x128xf32> to vector<8x32xf32>
    %40 = arith.mulf %37, %24 : vector<8x32xf32>
    %41 = arith.mulf %36, %38 : vector<8x32xf32>
    %42 = arith.addf %40, %41 : vector<8x32xf32>
    %43 = math.tanh %42 : vector<8x32xf32>
    %44 = arith.mulf %39, %43 : vector<8x32xf32>
    %45 = vector.extract_strided_slice %6 {offsets = [16, 0], sizes = [8, 128], strides = [1, 1]} : vector<64x128xf32> to vector<8x128xf32>
    %cst_13 = arith.constant dense<0.000000e+00> : vector<8x128xf32>
    %46 = tpu.matmul %44, %2, %cst_13 {dimension_numbers = #tpu.dot_dimension_numbers<[1], [0], [0], [1], [0, 0, 1, 1], [], []>} : vector<8x32xf32>, vector<32x128xf32>, vector<8x128xf32> -> vector<8x128xf32>
    %47 = arith.addf %45, %46 : vector<8x128xf32>
    %48 = arith.negf %47 : vector<8x128xf32>
    %49 = math.exp %48 : vector<8x128xf32>
    %cst_14 = arith.constant 1.000000e+00 : f32
    %50 = vector.broadcast %cst_14 : f32 to vector<8x128xf32>
    %51 = arith.addf %50, %49 : vector<8x128xf32>
    %52 = arith.divf %50, %51 : vector<8x128xf32>
    %53 = math.tanh %47 : vector<8x128xf32>
    %54 = vector.extract_strided_slice %52 {offsets = [0, 0], sizes = [8, 32], strides = [1, 1]} : vector<8x128xf32> to vector<8x32xf32>
    %55 = vector.extract_strided_slice %52 {offsets = [0, 32], sizes = [8, 32], strides = [1, 1]} : vector<8x128xf32> to vector<8x32xf32>
    %56 = vector.extract_strided_slice %53 {offsets = [0, 64], sizes = [8, 32], strides = [1, 1]} : vector<8x128xf32> to vector<8x32xf32>
    %57 = vector.extract_strided_slice %52 {offsets = [0, 96], sizes = [8, 32], strides = [1, 1]} : vector<8x128xf32> to vector<8x32xf32>
    %58 = arith.mulf %55, %42 : vector<8x32xf32>
    %59 = arith.mulf %54, %56 : vector<8x32xf32>
    %60 = arith.addf %58, %59 : vector<8x32xf32>
    %61 = math.tanh %60 : vector<8x32xf32>
    %62 = arith.mulf %57, %61 : vector<8x32xf32>
    %63 = vector.extract_strided_slice %6 {offsets = [24, 0], sizes = [8, 128], strides = [1, 1]} : vector<64x128xf32> to vector<8x128xf32>
    %cst_15 = arith.constant dense<0.000000e+00> : vector<8x128xf32>
    %64 = tpu.matmul %62, %2, %cst_15 {dimension_numbers = #tpu.dot_dimension_numbers<[1], [0], [0], [1], [0, 0, 1, 1], [], []>} : vector<8x32xf32>, vector<32x128xf32>, vector<8x128xf32> -> vector<8x128xf32>
    %65 = arith.addf %63, %64 : vector<8x128xf32>
    %66 = arith.negf %65 : vector<8x128xf32>
    %67 = math.exp %66 : vector<8x128xf32>
    %cst_16 = arith.constant 1.000000e+00 : f32
    %68 = vector.broadcast %cst_16 : f32 to vector<8x128xf32>
    %69 = arith.addf %68, %67 : vector<8x128xf32>
    %70 = arith.divf %68, %69 : vector<8x128xf32>
    %71 = math.tanh %65 : vector<8x128xf32>
    %72 = vector.extract_strided_slice %70 {offsets = [0, 0], sizes = [8, 32], strides = [1, 1]} : vector<8x128xf32> to vector<8x32xf32>
    %73 = vector.extract_strided_slice %70 {offsets = [0, 32], sizes = [8, 32], strides = [1, 1]} : vector<8x128xf32> to vector<8x32xf32>
    %74 = vector.extract_strided_slice %71 {offsets = [0, 64], sizes = [8, 32], strides = [1, 1]} : vector<8x128xf32> to vector<8x32xf32>
    %75 = vector.extract_strided_slice %70 {offsets = [0, 96], sizes = [8, 32], strides = [1, 1]} : vector<8x128xf32> to vector<8x32xf32>
    %76 = arith.mulf %73, %60 : vector<8x32xf32>
    %77 = arith.mulf %72, %74 : vector<8x32xf32>
    %78 = arith.addf %76, %77 : vector<8x32xf32>
    %79 = math.tanh %78 : vector<8x32xf32>
    %80 = arith.mulf %75, %79 : vector<8x32xf32>
    %81 = vector.extract_strided_slice %6 {offsets = [32, 0], sizes = [8, 128], strides = [1, 1]} : vector<64x128xf32> to vector<8x128xf32>
    %cst_17 = arith.constant dense<0.000000e+00> : vector<8x128xf32>
    %82 = tpu.matmul %80, %2, %cst_17 {dimension_numbers = #tpu.dot_dimension_numbers<[1], [0], [0], [1], [0, 0, 1, 1], [], []>} : vector<8x32xf32>, vector<32x128xf32>, vector<8x128xf32> -> vector<8x128xf32>
    %83 = arith.addf %81, %82 : vector<8x128xf32>
    %84 = arith.negf %83 : vector<8x128xf32>
    %85 = math.exp %84 : vector<8x128xf32>
    %cst_18 = arith.constant 1.000000e+00 : f32
    %86 = vector.broadcast %cst_18 : f32 to vector<8x128xf32>
    %87 = arith.addf %86, %85 : vector<8x128xf32>
    %88 = arith.divf %86, %87 : vector<8x128xf32>
    %89 = math.tanh %83 : vector<8x128xf32>
    %90 = vector.extract_strided_slice %88 {offsets = [0, 0], sizes = [8, 32], strides = [1, 1]} : vector<8x128xf32> to vector<8x32xf32>
    %91 = vector.extract_strided_slice %88 {offsets = [0, 32], sizes = [8, 32], strides = [1, 1]} : vector<8x128xf32> to vector<8x32xf32>
    %92 = vector.extract_strided_slice %89 {offsets = [0, 64], sizes = [8, 32], strides = [1, 1]} : vector<8x128xf32> to vector<8x32xf32>
    %93 = vector.extract_strided_slice %88 {offsets = [0, 96], sizes = [8, 32], strides = [1, 1]} : vector<8x128xf32> to vector<8x32xf32>
    %94 = arith.mulf %91, %78 : vector<8x32xf32>
    %95 = arith.mulf %90, %92 : vector<8x32xf32>
    %96 = arith.addf %94, %95 : vector<8x32xf32>
    %97 = math.tanh %96 : vector<8x32xf32>
    %98 = arith.mulf %93, %97 : vector<8x32xf32>
    %99 = vector.extract_strided_slice %6 {offsets = [40, 0], sizes = [8, 128], strides = [1, 1]} : vector<64x128xf32> to vector<8x128xf32>
    %cst_19 = arith.constant dense<0.000000e+00> : vector<8x128xf32>
    %100 = tpu.matmul %98, %2, %cst_19 {dimension_numbers = #tpu.dot_dimension_numbers<[1], [0], [0], [1], [0, 0, 1, 1], [], []>} : vector<8x32xf32>, vector<32x128xf32>, vector<8x128xf32> -> vector<8x128xf32>
    %101 = arith.addf %99, %100 : vector<8x128xf32>
    %102 = arith.negf %101 : vector<8x128xf32>
    %103 = math.exp %102 : vector<8x128xf32>
    %cst_20 = arith.constant 1.000000e+00 : f32
    %104 = vector.broadcast %cst_20 : f32 to vector<8x128xf32>
    %105 = arith.addf %104, %103 : vector<8x128xf32>
    %106 = arith.divf %104, %105 : vector<8x128xf32>
    %107 = math.tanh %101 : vector<8x128xf32>
    %108 = vector.extract_strided_slice %106 {offsets = [0, 0], sizes = [8, 32], strides = [1, 1]} : vector<8x128xf32> to vector<8x32xf32>
    %109 = vector.extract_strided_slice %106 {offsets = [0, 32], sizes = [8, 32], strides = [1, 1]} : vector<8x128xf32> to vector<8x32xf32>
    %110 = vector.extract_strided_slice %107 {offsets = [0, 64], sizes = [8, 32], strides = [1, 1]} : vector<8x128xf32> to vector<8x32xf32>
    %111 = vector.extract_strided_slice %106 {offsets = [0, 96], sizes = [8, 32], strides = [1, 1]} : vector<8x128xf32> to vector<8x32xf32>
    %112 = arith.mulf %109, %96 : vector<8x32xf32>
    %113 = arith.mulf %108, %110 : vector<8x32xf32>
    %114 = arith.addf %112, %113 : vector<8x32xf32>
    %115 = math.tanh %114 : vector<8x32xf32>
    %116 = arith.mulf %111, %115 : vector<8x32xf32>
    %117 = vector.extract_strided_slice %6 {offsets = [48, 0], sizes = [8, 128], strides = [1, 1]} : vector<64x128xf32> to vector<8x128xf32>
    %cst_21 = arith.constant dense<0.000000e+00> : vector<8x128xf32>
    %118 = tpu.matmul %116, %2, %cst_21 {dimension_numbers = #tpu.dot_dimension_numbers<[1], [0], [0], [1], [0, 0, 1, 1], [], []>} : vector<8x32xf32>, vector<32x128xf32>, vector<8x128xf32> -> vector<8x128xf32>
    %119 = arith.addf %117, %118 : vector<8x128xf32>
    %120 = arith.negf %119 : vector<8x128xf32>
    %121 = math.exp %120 : vector<8x128xf32>
    %cst_22 = arith.constant 1.000000e+00 : f32
    %122 = vector.broadcast %cst_22 : f32 to vector<8x128xf32>
    %123 = arith.addf %122, %121 : vector<8x128xf32>
    %124 = arith.divf %122, %123 : vector<8x128xf32>
    %125 = math.tanh %119 : vector<8x128xf32>
    %126 = vector.extract_strided_slice %124 {offsets = [0, 0], sizes = [8, 32], strides = [1, 1]} : vector<8x128xf32> to vector<8x32xf32>
    %127 = vector.extract_strided_slice %124 {offsets = [0, 32], sizes = [8, 32], strides = [1, 1]} : vector<8x128xf32> to vector<8x32xf32>
    %128 = vector.extract_strided_slice %125 {offsets = [0, 64], sizes = [8, 32], strides = [1, 1]} : vector<8x128xf32> to vector<8x32xf32>
    %129 = vector.extract_strided_slice %124 {offsets = [0, 96], sizes = [8, 32], strides = [1, 1]} : vector<8x128xf32> to vector<8x32xf32>
    %130 = arith.mulf %127, %114 : vector<8x32xf32>
    %131 = arith.mulf %126, %128 : vector<8x32xf32>
    %132 = arith.addf %130, %131 : vector<8x32xf32>
    %133 = math.tanh %132 : vector<8x32xf32>
    %134 = arith.mulf %129, %133 : vector<8x32xf32>
    %135 = vector.extract_strided_slice %6 {offsets = [56, 0], sizes = [8, 128], strides = [1, 1]} : vector<64x128xf32> to vector<8x128xf32>
    %cst_23 = arith.constant dense<0.000000e+00> : vector<8x128xf32>
    %136 = tpu.matmul %134, %2, %cst_23 {dimension_numbers = #tpu.dot_dimension_numbers<[1], [0], [0], [1], [0, 0, 1, 1], [], []>} : vector<8x32xf32>, vector<32x128xf32>, vector<8x128xf32> -> vector<8x128xf32>
    %137 = arith.addf %135, %136 : vector<8x128xf32>
    %138 = arith.negf %137 : vector<8x128xf32>
    %139 = math.exp %138 : vector<8x128xf32>
    %cst_24 = arith.constant 1.000000e+00 : f32
    %140 = vector.broadcast %cst_24 : f32 to vector<8x128xf32>
    %141 = arith.addf %140, %139 : vector<8x128xf32>
    %142 = arith.divf %140, %141 : vector<8x128xf32>
    %143 = math.tanh %137 : vector<8x128xf32>
    %144 = vector.extract_strided_slice %142 {offsets = [0, 0], sizes = [8, 32], strides = [1, 1]} : vector<8x128xf32> to vector<8x32xf32>
    %145 = vector.extract_strided_slice %142 {offsets = [0, 32], sizes = [8, 32], strides = [1, 1]} : vector<8x128xf32> to vector<8x32xf32>
    %146 = vector.extract_strided_slice %143 {offsets = [0, 64], sizes = [8, 32], strides = [1, 1]} : vector<8x128xf32> to vector<8x32xf32>
    %147 = vector.extract_strided_slice %142 {offsets = [0, 96], sizes = [8, 32], strides = [1, 1]} : vector<8x128xf32> to vector<8x32xf32>
    %148 = arith.mulf %145, %132 : vector<8x32xf32>
    %149 = arith.mulf %144, %146 : vector<8x32xf32>
    %150 = arith.addf %148, %149 : vector<8x32xf32>
    %151 = math.tanh %150 : vector<8x32xf32>
    %152 = arith.mulf %147, %151 : vector<8x32xf32>
    %153 = tpu.concatenate %26, %44, %62, %80, %98, %116, %134, %152 in 0 : vector<8x32xf32>, vector<8x32xf32>, vector<8x32xf32>, vector<8x32xf32>, vector<8x32xf32>, vector<8x32xf32>, vector<8x32xf32>, vector<8x32xf32> -> vector<64x32xf32>
    %c0_25 = arith.constant 0 : index
    %c0_26 = arith.constant 0 : index
    %154 = vector.load %arg5[%c0_25, %c0_26] : memref<32x128xf32, #tpu.memory_space<vmem>>, vector<32x128xf32>
    %c0_27 = arith.constant 0 : index
    %c0_28 = arith.constant 0 : index
    %155 = vector.load %arg6[%c0_27, %c0_28] : memref<32x128xf32, #tpu.memory_space<vmem>>, vector<32x128xf32>
    %c0_29 = arith.constant 0 : index
    %c0_30 = arith.constant 0 : index
    %156 = vector.load %arg7[%c0_29, %c0_30] : memref<1x128xf32, #tpu.memory_space<vmem>>, vector<1x128xf32>
    %cst_31 = arith.constant dense<0.000000e+00> : vector<64x128xf32>
    %157 = tpu.matmul %153, %154, %cst_31 {dimension_numbers = #tpu.dot_dimension_numbers<[1], [0], [0], [1], [0, 0, 1, 1], [], []>} : vector<64x32xf32>, vector<32x128xf32>, vector<64x128xf32> -> vector<64x128xf32>
    %158 = vector.broadcast %156 : vector<1x128xf32> to vector<64x128xf32>
    %159 = arith.addf %157, %158 : vector<64x128xf32>
    %cst_32 = arith.constant 0.000000e+00 : f32
    %160 = vector.broadcast %cst_32 : f32 to vector<8x32xf32>
    %cst_33 = arith.constant 0.000000e+00 : f32
    %161 = vector.broadcast %cst_33 : f32 to vector<8x32xf32>
    %162 = vector.extract_strided_slice %159 {offsets = [0, 0], sizes = [8, 128], strides = [1, 1]} : vector<64x128xf32> to vector<8x128xf32>
    %cst_34 = arith.constant dense<0.000000e+00> : vector<8x128xf32>
    %163 = tpu.matmul %160, %155, %cst_34 {dimension_numbers = #tpu.dot_dimension_numbers<[1], [0], [0], [1], [0, 0, 1, 1], [], []>} : vector<8x32xf32>, vector<32x128xf32>, vector<8x128xf32> -> vector<8x128xf32>
    %164 = arith.addf %162, %163 : vector<8x128xf32>
    %165 = arith.negf %164 : vector<8x128xf32>
    %166 = math.exp %165 : vector<8x128xf32>
    %cst_35 = arith.constant 1.000000e+00 : f32
    %167 = vector.broadcast %cst_35 : f32 to vector<8x128xf32>
    %168 = arith.addf %167, %166 : vector<8x128xf32>
    %169 = arith.divf %167, %168 : vector<8x128xf32>
    %170 = math.tanh %164 : vector<8x128xf32>
    %171 = vector.extract_strided_slice %169 {offsets = [0, 0], sizes = [8, 32], strides = [1, 1]} : vector<8x128xf32> to vector<8x32xf32>
    %172 = vector.extract_strided_slice %169 {offsets = [0, 32], sizes = [8, 32], strides = [1, 1]} : vector<8x128xf32> to vector<8x32xf32>
    %173 = vector.extract_strided_slice %170 {offsets = [0, 64], sizes = [8, 32], strides = [1, 1]} : vector<8x128xf32> to vector<8x32xf32>
    %174 = vector.extract_strided_slice %169 {offsets = [0, 96], sizes = [8, 32], strides = [1, 1]} : vector<8x128xf32> to vector<8x32xf32>
    %175 = arith.mulf %172, %161 : vector<8x32xf32>
    %176 = arith.mulf %171, %173 : vector<8x32xf32>
    %177 = arith.addf %175, %176 : vector<8x32xf32>
    %178 = math.tanh %177 : vector<8x32xf32>
    %179 = arith.mulf %174, %178 : vector<8x32xf32>
    %180 = vector.extract_strided_slice %159 {offsets = [8, 0], sizes = [8, 128], strides = [1, 1]} : vector<64x128xf32> to vector<8x128xf32>
    %cst_36 = arith.constant dense<0.000000e+00> : vector<8x128xf32>
    %181 = tpu.matmul %179, %155, %cst_36 {dimension_numbers = #tpu.dot_dimension_numbers<[1], [0], [0], [1], [0, 0, 1, 1], [], []>} : vector<8x32xf32>, vector<32x128xf32>, vector<8x128xf32> -> vector<8x128xf32>
    %182 = arith.addf %180, %181 : vector<8x128xf32>
    %183 = arith.negf %182 : vector<8x128xf32>
    %184 = math.exp %183 : vector<8x128xf32>
    %cst_37 = arith.constant 1.000000e+00 : f32
    %185 = vector.broadcast %cst_37 : f32 to vector<8x128xf32>
    %186 = arith.addf %185, %184 : vector<8x128xf32>
    %187 = arith.divf %185, %186 : vector<8x128xf32>
    %188 = math.tanh %182 : vector<8x128xf32>
    %189 = vector.extract_strided_slice %187 {offsets = [0, 0], sizes = [8, 32], strides = [1, 1]} : vector<8x128xf32> to vector<8x32xf32>
    %190 = vector.extract_strided_slice %187 {offsets = [0, 32], sizes = [8, 32], strides = [1, 1]} : vector<8x128xf32> to vector<8x32xf32>
    %191 = vector.extract_strided_slice %188 {offsets = [0, 64], sizes = [8, 32], strides = [1, 1]} : vector<8x128xf32> to vector<8x32xf32>
    %192 = vector.extract_strided_slice %187 {offsets = [0, 96], sizes = [8, 32], strides = [1, 1]} : vector<8x128xf32> to vector<8x32xf32>
    %193 = arith.mulf %190, %177 : vector<8x32xf32>
    %194 = arith.mulf %189, %191 : vector<8x32xf32>
    %195 = arith.addf %193, %194 : vector<8x32xf32>
    %196 = math.tanh %195 : vector<8x32xf32>
    %197 = arith.mulf %192, %196 : vector<8x32xf32>
    %198 = vector.extract_strided_slice %159 {offsets = [16, 0], sizes = [8, 128], strides = [1, 1]} : vector<64x128xf32> to vector<8x128xf32>
    %cst_38 = arith.constant dense<0.000000e+00> : vector<8x128xf32>
    %199 = tpu.matmul %197, %155, %cst_38 {dimension_numbers = #tpu.dot_dimension_numbers<[1], [0], [0], [1], [0, 0, 1, 1], [], []>} : vector<8x32xf32>, vector<32x128xf32>, vector<8x128xf32> -> vector<8x128xf32>
    %200 = arith.addf %198, %199 : vector<8x128xf32>
    %201 = arith.negf %200 : vector<8x128xf32>
    %202 = math.exp %201 : vector<8x128xf32>
    %cst_39 = arith.constant 1.000000e+00 : f32
    %203 = vector.broadcast %cst_39 : f32 to vector<8x128xf32>
    %204 = arith.addf %203, %202 : vector<8x128xf32>
    %205 = arith.divf %203, %204 : vector<8x128xf32>
    %206 = math.tanh %200 : vector<8x128xf32>
    %207 = vector.extract_strided_slice %205 {offsets = [0, 0], sizes = [8, 32], strides = [1, 1]} : vector<8x128xf32> to vector<8x32xf32>
    %208 = vector.extract_strided_slice %205 {offsets = [0, 32], sizes = [8, 32], strides = [1, 1]} : vector<8x128xf32> to vector<8x32xf32>
    %209 = vector.extract_strided_slice %206 {offsets = [0, 64], sizes = [8, 32], strides = [1, 1]} : vector<8x128xf32> to vector<8x32xf32>
    %210 = vector.extract_strided_slice %205 {offsets = [0, 96], sizes = [8, 32], strides = [1, 1]} : vector<8x128xf32> to vector<8x32xf32>
    %211 = arith.mulf %208, %195 : vector<8x32xf32>
    %212 = arith.mulf %207, %209 : vector<8x32xf32>
    %213 = arith.addf %211, %212 : vector<8x32xf32>
    %214 = math.tanh %213 : vector<8x32xf32>
    %215 = arith.mulf %210, %214 : vector<8x32xf32>
    %216 = vector.extract_strided_slice %159 {offsets = [24, 0], sizes = [8, 128], strides = [1, 1]} : vector<64x128xf32> to vector<8x128xf32>
    %cst_40 = arith.constant dense<0.000000e+00> : vector<8x128xf32>
    %217 = tpu.matmul %215, %155, %cst_40 {dimension_numbers = #tpu.dot_dimension_numbers<[1], [0], [0], [1], [0, 0, 1, 1], [], []>} : vector<8x32xf32>, vector<32x128xf32>, vector<8x128xf32> -> vector<8x128xf32>
    %218 = arith.addf %216, %217 : vector<8x128xf32>
    %219 = arith.negf %218 : vector<8x128xf32>
    %220 = math.exp %219 : vector<8x128xf32>
    %cst_41 = arith.constant 1.000000e+00 : f32
    %221 = vector.broadcast %cst_41 : f32 to vector<8x128xf32>
    %222 = arith.addf %221, %220 : vector<8x128xf32>
    %223 = arith.divf %221, %222 : vector<8x128xf32>
    %224 = math.tanh %218 : vector<8x128xf32>
    %225 = vector.extract_strided_slice %223 {offsets = [0, 0], sizes = [8, 32], strides = [1, 1]} : vector<8x128xf32> to vector<8x32xf32>
    %226 = vector.extract_strided_slice %223 {offsets = [0, 32], sizes = [8, 32], strides = [1, 1]} : vector<8x128xf32> to vector<8x32xf32>
    %227 = vector.extract_strided_slice %224 {offsets = [0, 64], sizes = [8, 32], strides = [1, 1]} : vector<8x128xf32> to vector<8x32xf32>
    %228 = vector.extract_strided_slice %223 {offsets = [0, 96], sizes = [8, 32], strides = [1, 1]} : vector<8x128xf32> to vector<8x32xf32>
    %229 = arith.mulf %226, %213 : vector<8x32xf32>
    %230 = arith.mulf %225, %227 : vector<8x32xf32>
    %231 = arith.addf %229, %230 : vector<8x32xf32>
    %232 = math.tanh %231 : vector<8x32xf32>
    %233 = arith.mulf %228, %232 : vector<8x32xf32>
    %234 = vector.extract_strided_slice %159 {offsets = [32, 0], sizes = [8, 128], strides = [1, 1]} : vector<64x128xf32> to vector<8x128xf32>
    %cst_42 = arith.constant dense<0.000000e+00> : vector<8x128xf32>
    %235 = tpu.matmul %233, %155, %cst_42 {dimension_numbers = #tpu.dot_dimension_numbers<[1], [0], [0], [1], [0, 0, 1, 1], [], []>} : vector<8x32xf32>, vector<32x128xf32>, vector<8x128xf32> -> vector<8x128xf32>
    %236 = arith.addf %234, %235 : vector<8x128xf32>
    %237 = arith.negf %236 : vector<8x128xf32>
    %238 = math.exp %237 : vector<8x128xf32>
    %cst_43 = arith.constant 1.000000e+00 : f32
    %239 = vector.broadcast %cst_43 : f32 to vector<8x128xf32>
    %240 = arith.addf %239, %238 : vector<8x128xf32>
    %241 = arith.divf %239, %240 : vector<8x128xf32>
    %242 = math.tanh %236 : vector<8x128xf32>
    %243 = vector.extract_strided_slice %241 {offsets = [0, 0], sizes = [8, 32], strides = [1, 1]} : vector<8x128xf32> to vector<8x32xf32>
    %244 = vector.extract_strided_slice %241 {offsets = [0, 32], sizes = [8, 32], strides = [1, 1]} : vector<8x128xf32> to vector<8x32xf32>
    %245 = vector.extract_strided_slice %242 {offsets = [0, 64], sizes = [8, 32], strides = [1, 1]} : vector<8x128xf32> to vector<8x32xf32>
    %246 = vector.extract_strided_slice %241 {offsets = [0, 96], sizes = [8, 32], strides = [1, 1]} : vector<8x128xf32> to vector<8x32xf32>
    %247 = arith.mulf %244, %231 : vector<8x32xf32>
    %248 = arith.mulf %243, %245 : vector<8x32xf32>
    %249 = arith.addf %247, %248 : vector<8x32xf32>
    %250 = math.tanh %249 : vector<8x32xf32>
    %251 = arith.mulf %246, %250 : vector<8x32xf32>
    %252 = vector.extract_strided_slice %159 {offsets = [40, 0], sizes = [8, 128], strides = [1, 1]} : vector<64x128xf32> to vector<8x128xf32>
    %cst_44 = arith.constant dense<0.000000e+00> : vector<8x128xf32>
    %253 = tpu.matmul %251, %155, %cst_44 {dimension_numbers = #tpu.dot_dimension_numbers<[1], [0], [0], [1], [0, 0, 1, 1], [], []>} : vector<8x32xf32>, vector<32x128xf32>, vector<8x128xf32> -> vector<8x128xf32>
    %254 = arith.addf %252, %253 : vector<8x128xf32>
    %255 = arith.negf %254 : vector<8x128xf32>
    %256 = math.exp %255 : vector<8x128xf32>
    %cst_45 = arith.constant 1.000000e+00 : f32
    %257 = vector.broadcast %cst_45 : f32 to vector<8x128xf32>
    %258 = arith.addf %257, %256 : vector<8x128xf32>
    %259 = arith.divf %257, %258 : vector<8x128xf32>
    %260 = math.tanh %254 : vector<8x128xf32>
    %261 = vector.extract_strided_slice %259 {offsets = [0, 0], sizes = [8, 32], strides = [1, 1]} : vector<8x128xf32> to vector<8x32xf32>
    %262 = vector.extract_strided_slice %259 {offsets = [0, 32], sizes = [8, 32], strides = [1, 1]} : vector<8x128xf32> to vector<8x32xf32>
    %263 = vector.extract_strided_slice %260 {offsets = [0, 64], sizes = [8, 32], strides = [1, 1]} : vector<8x128xf32> to vector<8x32xf32>
    %264 = vector.extract_strided_slice %259 {offsets = [0, 96], sizes = [8, 32], strides = [1, 1]} : vector<8x128xf32> to vector<8x32xf32>
    %265 = arith.mulf %262, %249 : vector<8x32xf32>
    %266 = arith.mulf %261, %263 : vector<8x32xf32>
    %267 = arith.addf %265, %266 : vector<8x32xf32>
    %268 = math.tanh %267 : vector<8x32xf32>
    %269 = arith.mulf %264, %268 : vector<8x32xf32>
    %270 = vector.extract_strided_slice %159 {offsets = [48, 0], sizes = [8, 128], strides = [1, 1]} : vector<64x128xf32> to vector<8x128xf32>
    %cst_46 = arith.constant dense<0.000000e+00> : vector<8x128xf32>
    %271 = tpu.matmul %269, %155, %cst_46 {dimension_numbers = #tpu.dot_dimension_numbers<[1], [0], [0], [1], [0, 0, 1, 1], [], []>} : vector<8x32xf32>, vector<32x128xf32>, vector<8x128xf32> -> vector<8x128xf32>
    %272 = arith.addf %270, %271 : vector<8x128xf32>
    %273 = arith.negf %272 : vector<8x128xf32>
    %274 = math.exp %273 : vector<8x128xf32>
    %cst_47 = arith.constant 1.000000e+00 : f32
    %275 = vector.broadcast %cst_47 : f32 to vector<8x128xf32>
    %276 = arith.addf %275, %274 : vector<8x128xf32>
    %277 = arith.divf %275, %276 : vector<8x128xf32>
    %278 = math.tanh %272 : vector<8x128xf32>
    %279 = vector.extract_strided_slice %277 {offsets = [0, 0], sizes = [8, 32], strides = [1, 1]} : vector<8x128xf32> to vector<8x32xf32>
    %280 = vector.extract_strided_slice %277 {offsets = [0, 32], sizes = [8, 32], strides = [1, 1]} : vector<8x128xf32> to vector<8x32xf32>
    %281 = vector.extract_strided_slice %278 {offsets = [0, 64], sizes = [8, 32], strides = [1, 1]} : vector<8x128xf32> to vector<8x32xf32>
    %282 = vector.extract_strided_slice %277 {offsets = [0, 96], sizes = [8, 32], strides = [1, 1]} : vector<8x128xf32> to vector<8x32xf32>
    %283 = arith.mulf %280, %267 : vector<8x32xf32>
    %284 = arith.mulf %279, %281 : vector<8x32xf32>
    %285 = arith.addf %283, %284 : vector<8x32xf32>
    %286 = math.tanh %285 : vector<8x32xf32>
    %287 = arith.mulf %282, %286 : vector<8x32xf32>
    %288 = vector.extract_strided_slice %159 {offsets = [56, 0], sizes = [8, 128], strides = [1, 1]} : vector<64x128xf32> to vector<8x128xf32>
    %cst_48 = arith.constant dense<0.000000e+00> : vector<8x128xf32>
    %289 = tpu.matmul %287, %155, %cst_48 {dimension_numbers = #tpu.dot_dimension_numbers<[1], [0], [0], [1], [0, 0, 1, 1], [], []>} : vector<8x32xf32>, vector<32x128xf32>, vector<8x128xf32> -> vector<8x128xf32>
    %290 = arith.addf %288, %289 : vector<8x128xf32>
    %291 = arith.negf %290 : vector<8x128xf32>
    %292 = math.exp %291 : vector<8x128xf32>
    %cst_49 = arith.constant 1.000000e+00 : f32
    %293 = vector.broadcast %cst_49 : f32 to vector<8x128xf32>
    %294 = arith.addf %293, %292 : vector<8x128xf32>
    %295 = arith.divf %293, %294 : vector<8x128xf32>
    %296 = math.tanh %290 : vector<8x128xf32>
    %297 = vector.extract_strided_slice %295 {offsets = [0, 0], sizes = [8, 32], strides = [1, 1]} : vector<8x128xf32> to vector<8x32xf32>
    %298 = vector.extract_strided_slice %295 {offsets = [0, 32], sizes = [8, 32], strides = [1, 1]} : vector<8x128xf32> to vector<8x32xf32>
    %299 = vector.extract_strided_slice %296 {offsets = [0, 64], sizes = [8, 32], strides = [1, 1]} : vector<8x128xf32> to vector<8x32xf32>
    %300 = vector.extract_strided_slice %295 {offsets = [0, 96], sizes = [8, 32], strides = [1, 1]} : vector<8x128xf32> to vector<8x32xf32>
    %301 = arith.mulf %298, %285 : vector<8x32xf32>
    %302 = arith.mulf %297, %299 : vector<8x32xf32>
    %303 = arith.addf %301, %302 : vector<8x32xf32>
    %304 = math.tanh %303 : vector<8x32xf32>
    %305 = arith.mulf %300, %304 : vector<8x32xf32>
    %c0_50 = arith.constant 0 : index
    %c0_51 = arith.constant 0 : index
    %306 = vector.load %arg8[%c0_50, %c0_51] : memref<32x128xf32, #tpu.memory_space<vmem>>, vector<32x128xf32>
    %cst_52 = arith.constant dense<0.000000e+00> : vector<8x128xf32>
    %307 = tpu.matmul %305, %306, %cst_52 {dimension_numbers = #tpu.dot_dimension_numbers<[1], [0], [0], [1], [0, 0, 1, 1], [], []>} : vector<8x32xf32>, vector<32x128xf32>, vector<8x128xf32> -> vector<8x128xf32>
    %c0_53 = arith.constant 0 : index
    %c0_54 = arith.constant 0 : index
    %308 = vector.load %arg9[%c0_53, %c0_54] : memref<1x128xf32, #tpu.memory_space<vmem>>, vector<1x128xf32>
    %309 = vector.broadcast %308 : vector<1x128xf32> to vector<8x128xf32>
    %310 = arith.addf %307, %309 : vector<8x128xf32>
    %c0_55 = arith.constant 0 : index
    %c0_56 = arith.constant 0 : index
    %311 = vector.load %arg10[%c0_55, %c0_56] : memref<8x128xf32, #tpu.memory_space<vmem>>, vector<8x128xf32>
    tpu.vector_store %arg10[%c0_55, %c0_56], %310 {strides = array<i32>} : memref<8x128xf32, #tpu.memory_space<vmem>>, vector<8x128xf32>,
    return
  }
  func.func @transform_0(%arg0: i32) -> (i32, i32) {
    %c0_i32 = arith.constant 0 : i32
    %c0_i32_0 = arith.constant 0 : i32
    %c0_i32_1 = arith.constant 0 : i32
    return %c0_i32, %c0_i32_0 : i32, i32
  }
  func.func @transform_1(%arg0: i32) -> (i32, i32) {
    %c0_i32 = arith.constant 0 : i32
    %c0_i32_0 = arith.constant 0 : i32
    %c0_i32_1 = arith.constant 0 : i32
    return %c0_i32, %c0_i32_0 : i32, i32
  }
  func.func @transform_2(%arg0: i32) -> (i32, i32) {
    %c0_i32 = arith.constant 0 : i32
    %c0_i32_0 = arith.constant 0 : i32
    %c0_i32_1 = arith.constant 0 : i32
    return %c0_i32, %c0_i32_0 : i32, i32
  }
  func.func @transform_3(%arg0: i32) -> (i32, i32) {
    %c0_i32 = arith.constant 0 : i32
    %c0_i32_0 = arith.constant 0 : i32
    %c0_i32_1 = arith.constant 0 : i32
    return %c0_i32, %c0_i32_0 : i32, i32
  }
  func.func @transform_4(%arg0: i32) -> (i32, i32) {
    %c0_i32 = arith.constant 0 : i32
    %c0_i32_0 = arith.constant 0 : i32
    %c0_i32_1 = arith.constant 0 : i32
    return %c0_i32, %c0_i32_0 : i32, i32
  }
  func.func @transform_5(%arg0: i32) -> (i32, i32) {
    %c0_i32 = arith.constant 0 : i32
    %c0_i32_0 = arith.constant 0 : i32
    %c0_i32_1 = arith.constant 0 : i32
    return %c0_i32, %c0_i32_0 : i32, i32
  }
  func.func @transform_6(%arg0: i32) -> (i32, i32) {
    %c0_i32 = arith.constant 0 : i32
    %c0_i32_0 = arith.constant 0 : i32
    %c0_i32_1 = arith.constant 0 : i32
    return %c0_i32, %c0_i32_0 : i32, i32
  }
  func.func @transform_7(%arg0: i32) -> (i32, i32) {
    %c0_i32 = arith.constant 0 : i32
    %c0_i32_0 = arith.constant 0 : i32
    %c0_i32_1 = arith.constant 0 : i32
    return %c0_i32, %c0_i32_0 : i32, i32
  }
  func.func @transform_8(%arg0: i32) -> (i32, i32) {
    %c0_i32 = arith.constant 0 : i32
    %c0_i32_0 = arith.constant 0 : i32
    %c0_i32_1 = arith.constant 0 : i32
    return %c0_i32, %c0_i32_0 : i32, i32
  }
  func.func @transform_9(%arg0: i32) -> (i32, i32) {
    %c0_i32 = arith.constant 0 : i32
    %c0_i32_0 = arith.constant 0 : i32
    %c0_i32_1 = arith.constant 0 : i32
    return %c0_i32, %c0_i32_0 : i32, i32
  }
}

</mosaic_0001>

<llo_original>
// kernel: tpu_custom_call.1
$region0: #{tpu_custom_call.1}
  #allocation0 [shape = 'u32[]', space=smem, size = 0x4, offset = 0x4, fixed_abs, tag = 'smem constant byte address 0x4 - core index']
  #allocation1 [shape = 'u32[72,128]{1,0:T(1,128)}', space=vmem, size = 0x9000, scoped, tag = 'internal scratch']
  %s0 = inlined_call_operand.vmem [shape: f32[64,16], index: 0, kind: input, shape index: {}]
  %s1 = inlined_call_operand.vmem [shape: f32[16,128], index: 1, kind: input, shape index: {}]
  %s2 = inlined_call_operand.vmem [shape: f32[32,128], index: 2, kind: input, shape index: {}]
  %s3 = inlined_call_operand.vmem [shape: f32[1,128], index: 3, kind: input, shape index: {}]
  %s4 = inlined_call_operand.vmem [shape: f32[32,128], index: 4, kind: input, shape index: {}]
  %s5 = inlined_call_operand.hbm [shape: f32[32,128], index: 5, kind: input, shape index: {}]
  %s6 = inlined_call_operand.vmem [shape: f32[1,128], index: 6, kind: input, shape index: {}]
  %s7 = inlined_call_operand.hbm [shape: f32[32,128], index: 7, kind: input, shape index: {}]
  %s8 = inlined_call_operand.vmem [shape: f32[1,128], index: 8, kind: input, shape index: {}]
  %s9 = inlined_call_operand.hbm [shape: f32[8,128], index: 9, kind: output, shape index: {}]
  %s10 = sld [smem:[#allocation0]]
  $region54: #{tpu_custom_call.1} parent=0
    _
  %s12 = ssub.s32 1, %s10
  %s13 = scalar_select 0, %s12, %s10
  $region1: #{tpu_custom_call.1} parent=0
    #allocation2 [shape = 'u8[16384]{0}', space=vmem, size = 0x4000, scoped, tag = 'input window, operand 5, single buffered']
    #allocation3 [shape = 's32[1]{0}', space=sflag, size = 0x4, scoped, tag = 'scoped memory for tpu_custom_call.1']
    #allocation4 [shape = 's32[1]{0}', space=sflag, size = 0x4, scoped, tag = 'scoped memory for tpu_custom_call.1']
    #allocation5 [shape = 'u8[16384]{0}', space=vmem, size = 0x4000, scoped, tag = 'input window, operand 7, single buffered']
    #allocation6 [shape = 's32[1]{0}', space=sflag, size = 0x4, scoped, tag = 'scoped memory for tpu_custom_call.1']
    #allocation7 [shape = 'u8[4096]{0}', space=vmem, size = 0x1000, scoped, tag = 'output window, operand 0, single buffered']
    %14 = vsyncpa [#allocation3], 0
    %15 = vsyncpa [#allocation6], 0
    %16 = vsyncpa [#allocation4], 0
    // Predicated region
    $region2: #{tpu_custom_call.1} parent=1 // pred_check
      _
    $region3: #{tpu_custom_call.1} parent=1 // pred_check_branch
      %18 = sbr.rel (0) target = $region5
    $region4: #{tpu_custom_call.1} parent=1 // pred_region
      _
    $region5: #{tpu_custom_call.1} parent=1 // pred_fallthru
      _
    // Predicated region
    $region6: #{tpu_custom_call.1} parent=1 // pred_check
      _
    $region7: #{tpu_custom_call.1} parent=1 // pred_check_branch
      %20 = sbr.rel (0) target = $region9
    $region8: #{tpu_custom_call.1} parent=1 // pred_region
      _
    $region9: #{tpu_custom_call.1} parent=1 // pred_fallthru
      _
    // Predicated region
    $region10: #{tpu_custom_call.1} parent=1 // pred_check
      _
    $region11: #{tpu_custom_call.1} parent=1 // pred_check_branch
      %22 = sbr.rel (0) target = $region13
    $region12: #{tpu_custom_call.1} parent=1 // pred_region
      _
    $region13: #{tpu_custom_call.1} parent=1 // pred_fallthru
      _
    // Predicated region
    $region14: #{tpu_custom_call.1} parent=1 // pred_check
      _
    $region15: #{tpu_custom_call.1} parent=1 // pred_check_branch
      %24 = sbr.rel (0) target = $region17
    $region16: #{tpu_custom_call.1} parent=1 // pred_region
      _
    $region17: #{tpu_custom_call.1} parent=1 // pred_fallthru
      _
    // Predicated region
    $region18: #{tpu_custom_call.1} parent=1 // pred_check
      _
    $region19: #{tpu_custom_call.1} parent=1 // pred_check_branch
      %26 = sbr.rel (0) target = $region21
    $region20: #{tpu_custom_call.1} parent=1 // pred_region
      _
    $region21: #{tpu_custom_call.1} parent=1 // pred_fallthru
      _
    // Predicated region
    $region22: #{tpu_custom_call.1} parent=1 // pred_check
      _
    $region23: #{tpu_custom_call.1} parent=1 // pred_check_branch
      %28 = sbr.rel (0) target = $region25
    $region24: #{tpu_custom_call.1} parent=1 // pred_region
      %30 = vsyncadd [#allocation3], 0
      %s31 = sshll.u32 %s5, 4
      %s32 = int_to_ptr.hbm [resolvable:$true] %s31
      %s33 = sshll.u32 [#allocation2], 4
      %s34 = int_to_ptr.vmem [resolvable:$true] %s33
      %39 = dma.hbm_to_vmem [thread:$0]  %s32, 512, %s34, [#allocation3], 128, 128, 8
    $region25: #{tpu_custom_call.1} parent=1 // pred_fallthru
      _
    // Predicated region
    $region26: #{tpu_custom_call.1} parent=1 // pred_check
      _
    $region27: #{tpu_custom_call.1} parent=1 // pred_check_branch
      %41 = sbr.rel (0) target = $region29
    $region28: #{tpu_custom_call.1} parent=1 // pred_region
      _
    $region29: #{tpu_custom_call.1} parent=1 // pred_fallthru
      _
    // Predicated region
    $region30: #{tpu_custom_call.1} parent=1 // pred_check
      _
    $region31: #{tpu_custom_call.1} parent=1 // pred_check_branch
      %43 = sbr.rel (0) target = $region33
    $region32: #{tpu_custom_call.1} parent=1 // pred_region
      %45 = vsyncadd [#allocation6], 0
      %s46 = sshll.u32 %s7, 4
      %s47 = int_to_ptr.hbm [resolvable:$true] %s46
      %s48 = sshll.u32 [#allocation5], 4
      %s49 = int_to_ptr.vmem [resolvable:$true] %s48
      %54 = dma.hbm_to_vmem [thread:$0]  %s47, 512, %s49, [#allocation6], 128, 128, 8
    $region33: #{tpu_custom_call.1} parent=1 // pred_fallthru
      _
    // Predicated region
    $region34: #{tpu_custom_call.1} parent=1 // pred_check
      _
    $region35: #{tpu_custom_call.1} parent=1 // pred_check_branch
      %56 = sbr.rel (0) target = $region37
    $region36: #{tpu_custom_call.1} parent=1 // pred_region
      _
    $region37: #{tpu_custom_call.1} parent=1 // pred_fallthru
      _
    // Predicated region
    $region38: #{tpu_custom_call.1} parent=1 // pred_check
      _
    $region39: #{tpu_custom_call.1} parent=1 // pred_check_branch
      %58 = sbr.rel (0) target = $region41
    $region40: #{tpu_custom_call.1} parent=1 // pred_region
      %60 = dma.done [#allocation3], 512
    $region41: #{tpu_custom_call.1} parent=1 // pred_fallthru
      _
    // Predicated region
    $region42: #{tpu_custom_call.1} parent=1 // pred_check
      _
    $region43: #{tpu_custom_call.1} parent=1 // pred_check_branch
      %62 = sbr.rel (0) target = $region45
    $region44: #{tpu_custom_call.1} parent=1 // pred_region
      %64 = dma.done [#allocation6], 512
    $region45: #{tpu_custom_call.1} parent=1 // pred_fallthru
      _
    %v65 = vld [vmem:[%s0] sm:$0xff]
    %v66 = vld [vmem:[%s0 + $0x8] sm:$0xff]
    %v67 = vld [vmem:[%s0 + $0x10] sm:$0xff]
    %v68 = vld [vmem:[%s0 + $0x18] sm:$0xff]
    %v69 = vld [vmem:[%s0 + $0x20] sm:$0xff]
    %v70 = vld [vmem:[%s0 + $0x28] sm:$0xff]
    %v71 = vld [vmem:[%s0 + $0x30] sm:$0xff]
    %v72 = vld [vmem:[%s0 + $0x38] sm:$0xff]
    %v73 = vld [vmem:[%s1] sm:$0xff]
    %v74 = vld [vmem:[%s1 + $0x8] sm:$0xff]
    %v75 = vld [vmem:[%s2] sm:$0xff]
    %v76 = vld [vmem:[%s2 + $0x8] sm:$0xff]
    %v77 = vld [vmem:[%s2 + $0x10] sm:$0xff]
    %v78 = vld [vmem:[%s2 + $0x18] sm:$0xff]
    %v79 = vld [vmem:[%s3] sm:$0x1]
    %v81 = vperm.slane %v79, 0
    %vm83 = vcmask 130048
    %v85 = vsel %vm83, %v65, 0
    %v88 = vsel %vm83, %v66, 0
    %v91 = vsel %vm83, %v67, 0
    %v94 = vsel %vm83, %v68, 0
    %v97 = vsel %vm83, %v69, 0
    %v100 = vsel %vm83, %v70, 0
    %v103 = vsel %vm83, %v71, 0
    %v106 = vsel %vm83, %v72, 0
    %108 = vmatpush.msra.mxu0 0.0
    %109 = vmatpush.msra.mxu0 0.0
    %110 = vmatpush.msra.mxu0 0.0
    %111 = vmatpush.msra.mxu0 0.0
    %112 = vmatpush.msra.mxu0 0.0
    %113 = vmatpush.msra.mxu0 0.0
    %114 = vmatpush.msra.mxu0 0.0
    %115 = vmatpush.msra.mxu0 0.0
    %116 = vmatpush.msra.mxu0 0.0
    %117 = vmatpush.msra.mxu0 0.0
    %118 = vmatpush.msra.mxu0 0.0
    %119 = vmatpush.msra.mxu0 0.0
    %120 = vmatpush.msra.mxu0 0.0
    %121 = vmatpush.msra.mxu0 0.0
    %122 = vmatpush.msra.mxu0 %v74
    %123 = vmatpush.msra.mxu0 %v73
    %124 = vmatmul.f32.gmra.mxu0 %v85
    %v125 = vpop.f32.mrf.mxu0
    %v126 = vadd.f32 %v81, %v125
    %127 = vmatmul.f32.gmra.mxu0 %v88
    %v128 = vpop.f32.mrf.mxu0
    %v129 = vadd.f32 %v81, %v128
    %130 = vmatmul.f32.gmra.mxu0 %v91
    %v131 = vpop.f32.mrf.mxu0
    %v132 = vadd.f32 %v81, %v131
    %133 = vmatmul.f32.gmra.mxu0 %v94
    %v134 = vpop.f32.mrf.mxu0
    %v135 = vadd.f32 %v81, %v134
    %136 = vmatmul.f32.gmra.mxu0 %v97
    %v137 = vpop.f32.mrf.mxu0
    %v138 = vadd.f32 %v81, %v137
    %139 = vmatmul.f32.gmra.mxu0 %v100
    %v140 = vpop.f32.mrf.mxu0
    %v141 = vadd.f32 %v81, %v140
    %142 = vmatmul.f32.gmra.mxu0 %v103
    %v143 = vpop.f32.mrf.mxu0
    %v144 = vadd.f32 %v81, %v143
    %145 = vmatmul.f32.gmra.mxu0 %v106
    %v146 = vpop.f32.mrf.mxu0
    %v147 = vadd.f32 %v81, %v146
    %148 = vdwg.mxu0
    %vm149 = vcmask 261120
    %v151 = vsel %vm149, 0.0, 0
    %153 = vmatpush.msra.mxu0 0.0
    %154 = vmatpush.msra.mxu0 0.0
    %155 = vmatpush.msra.mxu0 0.0
    %156 = vmatpush.msra.mxu0 0.0
    %157 = vmatpush.msra.mxu0 0.0
    %158 = vmatpush.msra.mxu0 0.0
    %159 = vmatpush.msra.mxu0 0.0
    %160 = vmatpush.msra.mxu0 0.0
    %161 = vmatpush.msra.mxu0 0.0
    %162 = vmatpush.msra.mxu0 0.0
    %163 = vmatpush.msra.mxu0 0.0
    %164 = vmatpush.msra.mxu0 0.0
    %165 = vmatpush.msra.mxu0 %v78
    %166 = vmatpush.msra.mxu0 %v77
    %167 = vmatpush.msra.mxu0 %v76
    %168 = vmatpush.msra.mxu0 %v75
    %169 = vmatmul.f32.gmra.mxu0 %v151
    %v170 = vpop.f32.mrf.mxu0
    %v171 = vadd.f32 0.0, %v170
    %172 = vdwg.mxu0
    %v173 = vadd.f32 %v126, %v171
    %v174 = vxor.u32 %v173, 2147483648
    %v175 = vmul.f32 %v174, 1.442695
    %v176 = vpow.pop %v175
    %v177 = vadd.f32 %v176, 1.0
    %v178 = vrcp.pop %v177
    %v179 = vmul.f32 %v177, %v178
    %v180 = vsub.f32 1.0, %v179
    %v181 = vmul.f32 %v178, %v180
    %v182 = vadd.f32 %v178, %v181
    %vm183 = vweird.f32 %v177
    %vm184 = vweird.f32 %v178
    %vm185 = vmor %vm183, %vm184
    %v186 = vsel %vm185, %v178, %v182
    %v187 = vand.u32 2147483647, %v177
    %vm188 = vcmp.eq.f32.partialorder %v187, 8.507059e+37
    %v189 = vand.u32 %v177, 2147483648
    %v190 = vor.u32 1.1754944e-38, %v189
    %v191 = vsel %vm188, %v190, %v186
    %v192 = vmul.f32 1.0, %v191
    %v193 = vtanh.pop %v173
    %v194 = vmul.f32 %v192, 0.0
    %196 = vrot.lane.b32.xlu0 %v193, 64
    %v197 = vpop.permute.xlu0 %196
    %v199 = vmul.f32 %v192, %v197
    %201 = vrot.lane.b32.xlu0 %v199, 32
    %v202 = vpop.permute.xlu0 %201
    %v204 = vadd.f32 %v194, %v202
    %v205 = vtanh.pop %v204
    %207 = vrot.lane.b32.xlu0 %v205, 64
    %v208 = vpop.permute.xlu0 %207
    %v210 = vmul.f32 %v192, %v208
    %212 = vrot.lane.b32.xlu0 %v210, 32
    %v213 = vpop.permute.xlu0 %212
    %v214 = vsel %vm149, %v213, 0
    %216 = vmatpush.msra.mxu0 0.0
    %217 = vmatpush.msra.mxu0 0.0
    %218 = vmatpush.msra.mxu0 0.0
    %219 = vmatpush.msra.mxu0 0.0
    %220 = vmatpush.msra.mxu0 0.0
    %221 = vmatpush.msra.mxu0 0.0
    %222 = vmatpush.msra.mxu0 0.0
    %223 = vmatpush.msra.mxu0 0.0
    %224 = vmatpush.msra.mxu0 0.0
    %225 = vmatpush.msra.mxu0 0.0
    %226 = vmatpush.msra.mxu0 0.0
    %227 = vmatpush.msra.mxu0 0.0
    %228 = vmatpush.msra.mxu0 %v78
    %229 = vmatpush.msra.mxu0 %v77
    %230 = vmatpush.msra.mxu0 %v76
    %231 = vmatpush.msra.mxu0 %v75
    %232 = vmatmul.f32.gmra.mxu0 %v214
    %v233 = vpop.f32.mrf.mxu0
    %v234 = vadd.f32 0.0, %v233
    %235 = vdwg.mxu0
    %v236 = vadd.f32 %v129, %v234
    %v237 = vxor.u32 %v236, 2147483648
    %v238 = vmul.f32 %v237, 1.442695
    %v239 = vpow.pop %v238
    %v240 = vadd.f32 %v239, 1.0
    %v241 = vrcp.pop %v240
    %v242 = vmul.f32 %v240, %v241
    %v243 = vsub.f32 1.0, %v242
    %v244 = vmul.f32 %v241, %v243
    %v245 = vadd.f32 %v241, %v244
    %vm246 = vweird.f32 %v240
    %vm247 = vweird.f32 %v241
    %vm248 = vmor %vm246, %vm247
    %v249 = vsel %vm248, %v241, %v245
    %v250 = vand.u32 2147483647, %v240
    %vm251 = vcmp.eq.f32.partialorder %v250, 8.507059e+37
    %v252 = vand.u32 %v240, 2147483648
    %v253 = vor.u32 1.1754944e-38, %v252
    %v254 = vsel %vm251, %v253, %v249
    %v255 = vmul.f32 1.0, %v254
    %v256 = vtanh.pop %v236
    %v257 = vmul.f32 %v255, %v204
    %259 = vrot.lane.b32.xlu0 %v256, 64
    %v260 = vpop.permute.xlu0 %259
    %v262 = vmul.f32 %v255, %v260
    %264 = vrot.lane.b32.xlu0 %v262, 32
    %v265 = vpop.permute.xlu0 %264
    %v267 = vadd.f32 %v257, %v265
    %v268 = vtanh.pop %v267
    %270 = vrot.lane.b32.xlu0 %v268, 64
    %v271 = vpop.permute.xlu0 %270
    %v273 = vmul.f32 %v255, %v271
    %275 = vrot.lane.b32.xlu0 %v273, 32
    %v276 = vpop.permute.xlu0 %275
    %v277 = vsel %vm149, %v276, 0
    %279 = vmatpush.msra.mxu0 0.0
    %280 = vmatpush.msra.mxu0 0.0
    %281 = vmatpush.msra.mxu0 0.0
    %282 = vmatpush.msra.mxu0 0.0
    %283 = vmatpush.msra.mxu0 0.0
    %284 = vmatpush.msra.mxu0 0.0
    %285 = vmatpush.msra.mxu0 0.0
    %286 = vmatpush.msra.mxu0 0.0
    %287 = vmatpush.msra.mxu0 0.0
    %288 = vmatpush.msra.mxu0 0.0
    %289 = vmatpush.msra.mxu0 0.0
    %290 = vmatpush.msra.mxu0 0.0
    %291 = vmatpush.msra.mxu0 %v78
    %292 = vmatpush.msra.mxu0 %v77
    %293 = vmatpush.msra.mxu0 %v76
    %294 = vmatpush.msra.mxu0 %v75
    %295 = vmatmul.f32.gmra.mxu0 %v277
    %v296 = vpop.f32.mrf.mxu0
    %v297 = vadd.f32 0.0, %v296
    %298 = vdwg.mxu0
    %v299 = vadd.f32 %v132, %v297
    %v300 = vxor.u32 %v299, 2147483648
    %v301 = vmul.f32 %v300, 1.442695
    %v302 = vpow.pop %v301
    %v303 = vadd.f32 %v302, 1.0
    %v304 = vrcp.pop %v303
    %v305 = vmul.f32 %v303, %v304
    %v306 = vsub.f32 1.0, %v305
    %v307 = vmul.f32 %v304, %v306
    %v308 = vadd.f32 %v304, %v307
    %vm309 = vweird.f32 %v303
    %vm310 = vweird.f32 %v304
    %vm311 = vmor %vm309, %vm310
    %v312 = vsel %vm311, %v304, %v308
    %v313 = vand.u32 2147483647, %v303
    %vm314 = vcmp.eq.f32.partialorder %v313, 8.507059e+37
    %v315 = vand.u32 %v303, 2147483648
    %v316 = vor.u32 1.1754944e-38, %v315
    %v317 = vsel %vm314, %v316, %v312
    %v318 = vmul.f32 1.0, %v317
    %v319 = vtanh.pop %v299
    %v320 = vmul.f32 %v318, %v267
    %322 = vrot.lane.b32.xlu0 %v319, 64
    %v323 = vpop.permute.xlu0 %322
    %v325 = vmul.f32 %v318, %v323
    %327 = vrot.lane.b32.xlu0 %v325, 32
    %v328 = vpop.permute.xlu0 %327
    %v330 = vadd.f32 %v320, %v328
    %v331 = vtanh.pop %v330
    %333 = vrot.lane.b32.xlu0 %v331, 64
    %v334 = vpop.permute.xlu0 %333
    %v336 = vmul.f32 %v318, %v334
    %338 = vrot.lane.b32.xlu0 %v336, 32
    %v339 = vpop.permute.xlu0 %338
    %v340 = vsel %vm149, %v339, 0
    %342 = vmatpush.msra.mxu0 0.0
    %343 = vmatpush.msra.mxu0 0.0
    %344 = vmatpush.msra.mxu0 0.0
    %345 = vmatpush.msra.mxu0 0.0
    %346 = vmatpush.msra.mxu0 0.0
    %347 = vmatpush.msra.mxu0 0.0
    %348 = vmatpush.msra.mxu0 0.0
    %349 = vmatpush.msra.mxu0 0.0
    %350 = vmatpush.msra.mxu0 0.0
    %351 = vmatpush.msra.mxu0 0.0
    %352 = vmatpush.msra.mxu0 0.0
    %353 = vmatpush.msra.mxu0 0.0
    %354 = vmatpush.msra.mxu0 %v78
    %355 = vmatpush.msra.mxu0 %v77
    %356 = vmatpush.msra.mxu0 %v76
    %357 = vmatpush.msra.mxu0 %v75
    %358 = vmatmul.f32.gmra.mxu0 %v340
    %v359 = vpop.f32.mrf.mxu0
    %v360 = vadd.f32 0.0, %v359
    %361 = vdwg.mxu0
    %v362 = vadd.f32 %v135, %v360
    %v363 = vxor.u32 %v362, 2147483648
    %v364 = vmul.f32 %v363, 1.442695
    %v365 = vpow.pop %v364
    %v366 = vadd.f32 %v365, 1.0
    %v367 = vrcp.pop %v366
    %v368 = vmul.f32 %v366, %v367
    %v369 = vsub.f32 1.0, %v368
    %v370 = vmul.f32 %v367, %v369
    %v371 = vadd.f32 %v367, %v370
    %vm372 = vweird.f32 %v366
    %vm373 = vweird.f32 %v367
    %vm374 = vmor %vm372, %vm373
    %v375 = vsel %vm374, %v367, %v371
    %v376 = vand.u32 2147483647, %v366
    %vm377 = vcmp.eq.f32.partialorder %v376, 8.507059e+37
    %v378 = vand.u32 %v366, 2147483648
    %v379 = vor.u32 1.1754944e-38, %v378
    %v380 = vsel %vm377, %v379, %v375
    %v381 = vmul.f32 1.0, %v380
    %v382 = vtanh.pop %v362
    %v383 = vmul.f32 %v381, %v330
    %385 = vrot.lane.b32.xlu0 %v382, 64
    %v386 = vpop.permute.xlu0 %385
    %v388 = vmul.f32 %v381, %v386
    %390 = vrot.lane.b32.xlu0 %v388, 32
    %v391 = vpop.permute.xlu0 %390
    %v393 = vadd.f32 %v383, %v391
    %v394 = vtanh.pop %v393
    %396 = vrot.lane.b32.xlu0 %v394, 64
    %v397 = vpop.permute.xlu0 %396
    %v399 = vmul.f32 %v381, %v397
    %401 = vrot.lane.b32.xlu0 %v399, 32
    %v402 = vpop.permute.xlu0 %401
    %v403 = vsel %vm149, %v402, 0
    %405 = vmatpush.msra.mxu0 0.0
    %406 = vmatpush.msra.mxu0 0.0
    %407 = vmatpush.msra.mxu0 0.0
    %408 = vmatpush.msra.mxu0 0.0
    %409 = vmatpush.msra.mxu0 0.0
    %410 = vmatpush.msra.mxu0 0.0
    %411 = vmatpush.msra.mxu0 0.0
    %412 = vmatpush.msra.mxu0 0.0
    %413 = vmatpush.msra.mxu0 0.0
    %414 = vmatpush.msra.mxu0 0.0
    %415 = vmatpush.msra.mxu0 0.0
    %416 = vmatpush.msra.mxu0 0.0
    %417 = vmatpush.msra.mxu0 %v78
    %418 = vmatpush.msra.mxu0 %v77
    %419 = vmatpush.msra.mxu0 %v76
    %420 = vmatpush.msra.mxu0 %v75
    %421 = vmatmul.f32.gmra.mxu0 %v403
    %v422 = vpop.f32.mrf.mxu0
    %v423 = vadd.f32 0.0, %v422
    %424 = vdwg.mxu0
    %v425 = vadd.f32 %v138, %v423
    %v426 = vxor.u32 %v425, 2147483648
    %v427 = vmul.f32 %v426, 1.442695
    %v428 = vpow.pop %v427
    %v429 = vadd.f32 %v428, 1.0
    %v430 = vrcp.pop %v429
    %v431 = vmul.f32 %v429, %v430
    %v432 = vsub.f32 1.0, %v431
    %v433 = vmul.f32 %v430, %v432
    %v434 = vadd.f32 %v430, %v433
    %vm435 = vweird.f32 %v429
    %vm436 = vweird.f32 %v430
    %vm437 = vmor %vm435, %vm436
    %v438 = vsel %vm437, %v430, %v434
    %v439 = vand.u32 2147483647, %v429
    %vm440 = vcmp.eq.f32.partialorder %v439, 8.507059e+37
    %v441 = vand.u32 %v429, 2147483648
    %v442 = vor.u32 1.1754944e-38, %v441
    %v443 = vsel %vm440, %v442, %v438
    %v444 = vmul.f32 1.0, %v443
    %v445 = vtanh.pop %v425
    %v446 = vmul.f32 %v444, %v393
    %448 = vrot.lane.b32.xlu0 %v445, 64
    %v449 = vpop.permute.xlu0 %448
    %v451 = vmul.f32 %v444, %v449
    %453 = vrot.lane.b32.xlu0 %v451, 32
    %v454 = vpop.permute.xlu0 %453
    %v456 = vadd.f32 %v446, %v454
    %v457 = vtanh.pop %v456
    %459 = vrot.lane.b32.xlu0 %v457, 64
    %v460 = vpop.permute.xlu0 %459
    %v462 = vmul.f32 %v444, %v460
    %464 = vrot.lane.b32.xlu0 %v462, 32
    %v465 = vpop.permute.xlu0 %464
    %v466 = vsel %vm149, %v465, 0
    %468 = vmatpush.msra.mxu0 0.0
    %469 = vmatpush.msra.mxu0 0.0
    %470 = vmatpush.msra.mxu0 0.0
    %471 = vmatpush.msra.mxu0 0.0
    %472 = vmatpush.msra.mxu0 0.0
    %473 = vmatpush.msra.mxu0 0.0
    %474 = vmatpush.msra.mxu0 0.0
    %475 = vmatpush.msra.mxu0 0.0
    %476 = vmatpush.msra.mxu0 0.0
    %477 = vmatpush.msra.mxu0 0.0
    %478 = vmatpush.msra.mxu0 0.0
    %479 = vmatpush.msra.mxu0 0.0
    %480 = vmatpush.msra.mxu0 %v78
    %481 = vmatpush.msra.mxu0 %v77
    %482 = vmatpush.msra.mxu0 %v76
    %483 = vmatpush.msra.mxu0 %v75
    %484 = vmatmul.f32.gmra.mxu0 %v466
    %v485 = vpop.f32.mrf.mxu0
    %v486 = vadd.f32 0.0, %v485
    %487 = vdwg.mxu0
    %v488 = vadd.f32 %v141, %v486
    %v489 = vxor.u32 %v488, 2147483648
    %v490 = vmul.f32 %v489, 1.442695
    %v491 = vpow.pop %v490
    %v492 = vadd.f32 %v491, 1.0
    %v493 = vrcp.pop %v492
    %v494 = vmul.f32 %v492, %v493
    %v495 = vsub.f32 1.0, %v494
    %v496 = vmul.f32 %v493, %v495
    %v497 = vadd.f32 %v493, %v496
    %vm498 = vweird.f32 %v492
    %vm499 = vweird.f32 %v493
    %vm500 = vmor %vm498, %vm499
    %v501 = vsel %vm500, %v493, %v497
    %v502 = vand.u32 2147483647, %v492
    %vm503 = vcmp.eq.f32.partialorder %v502, 8.507059e+37
    %v504 = vand.u32 %v492, 2147483648
    %v505 = vor.u32 1.1754944e-38, %v504
    %v506 = vsel %vm503, %v505, %v501
    %v507 = vmul.f32 1.0, %v506
    %v508 = vtanh.pop %v488
    %v509 = vmul.f32 %v507, %v456
    %511 = vrot.lane.b32.xlu0 %v508, 64
    %v512 = vpop.permute.xlu0 %511
    %v514 = vmul.f32 %v507, %v512
    %516 = vrot.lane.b32.xlu0 %v514, 32
    %v517 = vpop.permute.xlu0 %516
    %v519 = vadd.f32 %v509, %v517
    %v520 = vtanh.pop %v519
    %522 = vrot.lane.b32.xlu0 %v520, 64
    %v523 = vpop.permute.xlu0 %522
    %v525 = vmul.f32 %v507, %v523
    %527 = vrot.lane.b32.xlu0 %v525, 32
    %v528 = vpop.permute.xlu0 %527
    %v529 = vsel %vm149, %v528, 0
    %531 = vmatpush.msra.mxu0 0.0
    %532 = vmatpush.msra.mxu0 0.0
    %533 = vmatpush.msra.mxu0 0.0
    %534 = vmatpush.msra.mxu0 0.0
    %535 = vmatpush.msra.mxu0 0.0
    %536 = vmatpush.msra.mxu0 0.0
    %537 = vmatpush.msra.mxu0 0.0
    %538 = vmatpush.msra.mxu0 0.0
    %539 = vmatpush.msra.mxu0 0.0
    %540 = vmatpush.msra.mxu0 0.0
    %541 = vmatpush.msra.mxu0 0.0
    %542 = vmatpush.msra.mxu0 0.0
    %543 = vmatpush.msra.mxu0 %v78
    %544 = vmatpush.msra.mxu0 %v77
    %545 = vmatpush.msra.mxu0 %v76
    %546 = vmatpush.msra.mxu0 %v75
    %547 = vmatmul.f32.gmra.mxu0 %v529
    %v548 = vpop.f32.mrf.mxu0
    %v549 = vadd.f32 0.0, %v548
    %550 = vdwg.mxu0
    %v551 = vadd.f32 %v144, %v549
    %v552 = vxor.u32 %v551, 2147483648
    %v553 = vmul.f32 %v552, 1.442695
    %v554 = vpow.pop %v553
    %v555 = vadd.f32 %v554, 1.0
    %v556 = vrcp.pop %v555
    %v557 = vmul.f32 %v555, %v556
    %v558 = vsub.f32 1.0, %v557
    %v559 = vmul.f32 %v556, %v558
    %v560 = vadd.f32 %v556, %v559
    %vm561 = vweird.f32 %v555
    %vm562 = vweird.f32 %v556
    %vm563 = vmor %vm561, %vm562
    %v564 = vsel %vm563, %v556, %v560
    %v565 = vand.u32 2147483647, %v555
    %vm566 = vcmp.eq.f32.partialorder %v565, 8.507059e+37
    %v567 = vand.u32 %v555, 2147483648
    %v568 = vor.u32 1.1754944e-38, %v567
    %v569 = vsel %vm566, %v568, %v564
    %v570 = vmul.f32 1.0, %v569
    %v571 = vtanh.pop %v551
    %v572 = vmul.f32 %v570, %v519
    %574 = vrot.lane.b32.xlu0 %v571, 64
    %v575 = vpop.permute.xlu0 %574
    %v577 = vmul.f32 %v570, %v575
    %579 = vrot.lane.b32.xlu0 %v577, 32
    %v580 = vpop.permute.xlu0 %579
    %v582 = vadd.f32 %v572, %v580
    %v583 = vtanh.pop %v582
    %585 = vrot.lane.b32.xlu0 %v583, 64
    %v586 = vpop.permute.xlu0 %585
    %v588 = vmul.f32 %v570, %v586
    %590 = vrot.lane.b32.xlu0 %v588, 32
    %v591 = vpop.permute.xlu0 %590
    %v592 = vsel %vm149, %v591, 0
    %594 = vmatpush.msra.mxu0 0.0
    %595 = vmatpush.msra.mxu0 0.0
    %596 = vmatpush.msra.mxu0 0.0
    %597 = vmatpush.msra.mxu0 0.0
    %598 = vmatpush.msra.mxu0 0.0
    %599 = vmatpush.msra.mxu0 0.0
    %600 = vmatpush.msra.mxu0 0.0
    %601 = vmatpush.msra.mxu0 0.0
    %602 = vmatpush.msra.mxu0 0.0
    %603 = vmatpush.msra.mxu0 0.0
    %604 = vmatpush.msra.mxu0 0.0
    %605 = vmatpush.msra.mxu0 0.0
    %606 = vmatpush.msra.mxu0 %v78
    %607 = vmatpush.msra.mxu0 %v77
    %608 = vmatpush.msra.mxu0 %v76
    %609 = vmatpush.msra.mxu0 %v75
    %610 = vmatmul.f32.gmra.mxu0 %v592
    %v611 = vpop.f32.mrf.mxu0
    %v612 = vadd.f32 0.0, %v611
    %613 = vdwg.mxu0
    %v614 = vadd.f32 %v147, %v612
    %v615 = vxor.u32 %v614, 2147483648
    %v616 = vmul.f32 %v615, 1.442695
    %v617 = vpow.pop %v616
    %v618 = vadd.f32 %v617, 1.0
    %v619 = vrcp.pop %v618
    %v620 = vmul.f32 %v618, %v619
    %v621 = vsub.f32 1.0, %v620
    %v622 = vmul.f32 %v619, %v621
    %v623 = vadd.f32 %v619, %v622
    %vm624 = vweird.f32 %v618
    %vm625 = vweird.f32 %v619
    %vm626 = vmor %vm624, %vm625
    %v627 = vsel %vm626, %v619, %v623
    %v628 = vand.u32 2147483647, %v618
    %vm629 = vcmp.eq.f32.partialorder %v628, 8.507059e+37
    %v630 = vand.u32 %v618, 2147483648
    %v631 = vor.u32 1.1754944e-38, %v630
    %v632 = vsel %vm629, %v631, %v627
    %v633 = vmul.f32 1.0, %v632
    %v634 = vtanh.pop %v614
    %v635 = vmul.f32 %v633, %v582
    %637 = vrot.lane.b32.xlu0 %v634, 64
    %v638 = vpop.permute.xlu0 %637
    %v640 = vmul.f32 %v633, %v638
    %642 = vrot.lane.b32.xlu0 %v640, 32
    %v643 = vpop.permute.xlu0 %642
    %v645 = vadd.f32 %v635, %v643
    %v646 = vtanh.pop %v645
    %648 = vrot.lane.b32.xlu0 %v646, 64
    %v649 = vpop.permute.xlu0 %648
    %v651 = vmul.f32 %v633, %v649
    %v652 = vld [vmem:[%s4] sm:$0xff]
    %v653 = vld [vmem:[%s4 + $0x8] sm:$0xff]
    %v654 = vld [vmem:[%s4 + $0x10] sm:$0xff]
    %v655 = vld [vmem:[%s4 + $0x18] sm:$0xff]
    %v656 = vld [vmem:[#allocation2] sm:$0xff]
    %v657 = vld [vmem:[#allocation2 + $0x8] sm:$0xff]
    %v658 = vld [vmem:[#allocation2 + $0x10] sm:$0xff]
    %v659 = vld [vmem:[#allocation2 + $0x18] sm:$0xff]
    %v660 = vld [vmem:[%s6] sm:$0x1]
    %v662 = vperm.slane %v660, 0
    %665 = vrot.lane.b32.xlu0 %v651, 32
    %v666 = vpop.permute.xlu0 %665
    %v667 = vsel %vm149, %v666, 0
    %669 = vmatpush.msra.mxu0 0.0
    %670 = vmatpush.msra.mxu0 0.0
    %671 = vmatpush.msra.mxu0 0.0
    %672 = vmatpush.msra.mxu0 0.0
    %673 = vmatpush.msra.mxu0 0.0
    %674 = vmatpush.msra.mxu0 0.0
    %675 = vmatpush.msra.mxu0 0.0
    %676 = vmatpush.msra.mxu0 0.0
    %677 = vmatpush.msra.mxu0 0.0
    %678 = vmatpush.msra.mxu0 0.0
    %679 = vmatpush.msra.mxu0 0.0
    %680 = vmatpush.msra.mxu0 0.0
    %681 = vmatpush.msra.mxu0 %v655
    %682 = vmatpush.msra.mxu0 %v654
    %683 = vmatpush.msra.mxu0 %v653
    %684 = vmatpush.msra.mxu0 %v652
    %685 = vmatmul.f32.gmra.mxu0 %v214
    %v686 = vpop.f32.mrf.mxu0
    %v687 = vadd.f32 %v662, %v686
    %688 = vmatmul.f32.gmra.mxu0 %v277
    %v689 = vpop.f32.mrf.mxu0
    %v690 = vadd.f32 %v662, %v689
    %691 = vmatmul.f32.gmra.mxu0 %v340
    %v692 = vpop.f32.mrf.mxu0
    %v693 = vadd.f32 %v662, %v692
    %694 = vmatmul.f32.gmra.mxu0 %v403
    %v695 = vpop.f32.mrf.mxu0
    %v696 = vadd.f32 %v662, %v695
    %697 = vmatmul.f32.gmra.mxu0 %v466
    %v698 = vpop.f32.mrf.mxu0
    %v699 = vadd.f32 %v662, %v698
    %700 = vmatmul.f32.gmra.mxu0 %v529
    %v701 = vpop.f32.mrf.mxu0
    %v702 = vadd.f32 %v662, %v701
    %703 = vmatmul.f32.gmra.mxu0 %v592
    %v704 = vpop.f32.mrf.mxu0
    %v705 = vadd.f32 %v662, %v704
    %706 = vmatmul.f32.gmra.mxu0 %v667
    %v707 = vpop.f32.mrf.mxu0
    %v708 = vadd.f32 %v662, %v707
    %709 = vdwg.mxu0
    %710 = vmatpush.msra.mxu0 0.0
    %711 = vmatpush.msra.mxu0 0.0
    %712 = vmatpush.msra.mxu0 0.0
    %713 = vmatpush.msra.mxu0 0.0
    %714 = vmatpush.msra.mxu0 0.0
    %715 = vmatpush.msra.mxu0 0.0
    %716 = vmatpush.msra.mxu0 0.0
    %717 = vmatpush.msra.mxu0 0.0
    %718 = vmatpush.msra.mxu0 0.0
    %719 = vmatpush.msra.mxu0 0.0
    %720 = vmatpush.msra.mxu0 0.0
    %721 = vmatpush.msra.mxu0 0.0
    %722 = vmatpush.msra.mxu0 %v659
    %723 = vmatpush.msra.mxu0 %v658
    %724 = vmatpush.msra.mxu0 %v657
    %725 = vmatpush.msra.mxu0 %v656
    %726 = vmatmul.f32.gmra.mxu0 %v151
    %v727 = vpop.f32.mrf.mxu0
    %v728 = vadd.f32 0.0, %v727
    %729 = vdwg.mxu0
    %v730 = vadd.f32 %v687, %v728
    %v731 = vxor.u32 %v730, 2147483648
    %v732 = vmul.f32 %v731, 1.442695
    %v733 = vpow.pop %v732
    %v734 = vadd.f32 %v733, 1.0
    %v735 = vrcp.pop %v734
    %v736 = vmul.f32 %v734, %v735
    %v737 = vsub.f32 1.0, %v736
    %v738 = vmul.f32 %v735, %v737
    %v739 = vadd.f32 %v735, %v738
    %vm740 = vweird.f32 %v734
    %vm741 = vweird.f32 %v735
    %vm742 = vmor %vm740, %vm741
    %v743 = vsel %vm742, %v735, %v739
    %v744 = vand.u32 2147483647, %v734
    %vm745 = vcmp.eq.f32.partialorder %v744, 8.507059e+37
    %v746 = vand.u32 %v734, 2147483648
    %v747 = vor.u32 1.1754944e-38, %v746
    %v748 = vsel %vm745, %v747, %v743
    %v749 = vmul.f32 1.0, %v748
    %v750 = vtanh.pop %v730
    %v751 = vmul.f32 %v749, 0.0
    %753 = vrot.lane.b32.xlu0 %v750, 64
    %v754 = vpop.permute.xlu0 %753
    %v756 = vmul.f32 %v749, %v754
    %758 = vrot.lane.b32.xlu0 %v756, 32
    %v759 = vpop.permute.xlu0 %758
    %v761 = vadd.f32 %v751, %v759
    %v762 = vtanh.pop %v761
    %764 = vrot.lane.b32.xlu0 %v762, 64
    %v765 = vpop.permute.xlu0 %764
    %v767 = vmul.f32 %v749, %v765
    %769 = vrot.lane.b32.xlu0 %v767, 32
    %v770 = vpop.permute.xlu0 %769
    %v771 = vsel %vm149, %v770, 0
    %773 = vmatpush.msra.mxu0 0.0
    %774 = vmatpush.msra.mxu0 0.0
    %775 = vmatpush.msra.mxu0 0.0
    %776 = vmatpush.msra.mxu0 0.0
    %777 = vmatpush.msra.mxu0 0.0
    %778 = vmatpush.msra.mxu0 0.0
    %779 = vmatpush.msra.mxu0 0.0
    %780 = vmatpush.msra.mxu0 0.0
    %781 = vmatpush.msra.mxu0 0.0
    %782 = vmatpush.msra.mxu0 0.0
    %783 = vmatpush.msra.mxu0 0.0
    %784 = vmatpush.msra.mxu0 0.0
    %785 = vmatpush.msra.mxu0 %v659
    %786 = vmatpush.msra.mxu0 %v658
    %787 = vmatpush.msra.mxu0 %v657
    %788 = vmatpush.msra.mxu0 %v656
    %789 = vmatmul.f32.gmra.mxu0 %v771
    %v790 = vpop.f32.mrf.mxu0
    %v791 = vadd.f32 0.0, %v790
    %792 = vdwg.mxu0
    %v793 = vadd.f32 %v690, %v791
    %v794 = vxor.u32 %v793, 2147483648
    %v795 = vmul.f32 %v794, 1.442695
    %v796 = vpow.pop %v795
    %v797 = vadd.f32 %v796, 1.0
    %v798 = vrcp.pop %v797
    %v799 = vmul.f32 %v797, %v798
    %v800 = vsub.f32 1.0, %v799
    %v801 = vmul.f32 %v798, %v800
    %v802 = vadd.f32 %v798, %v801
    %vm803 = vweird.f32 %v797
    %vm804 = vweird.f32 %v798
    %vm805 = vmor %vm803, %vm804
    %v806 = vsel %vm805, %v798, %v802
    %v807 = vand.u32 2147483647, %v797
    %vm808 = vcmp.eq.f32.partialorder %v807, 8.507059e+37
    %v809 = vand.u32 %v797, 2147483648
    %v810 = vor.u32 1.1754944e-38, %v809
    %v811 = vsel %vm808, %v810, %v806
    %v812 = vmul.f32 1.0, %v811
    %v813 = vtanh.pop %v793
    %v814 = vmul.f32 %v812, %v761
    %816 = vrot.lane.b32.xlu0 %v813, 64
    %v817 = vpop.permute.xlu0 %816
    %v819 = vmul.f32 %v812, %v817
    %821 = vrot.lane.b32.xlu0 %v819, 32
    %v822 = vpop.permute.xlu0 %821
    %v824 = vadd.f32 %v814, %v822
    %v825 = vtanh.pop %v824
    %827 = vrot.lane.b32.xlu0 %v825, 64
    %v828 = vpop.permute.xlu0 %827
    %v830 = vmul.f32 %v812, %v828
    %832 = vrot.lane.b32.xlu0 %v830, 32
    %v833 = vpop.permute.xlu0 %832
    %v834 = vsel %vm149, %v833, 0
    %836 = vmatpush.msra.mxu0 0.0
    %837 = vmatpush.msra.mxu0 0.0
    %838 = vmatpush.msra.mxu0 0.0
    %839 = vmatpush.msra.mxu0 0.0
    %840 = vmatpush.msra.mxu0 0.0
    %841 = vmatpush.msra.mxu0 0.0
    %842 = vmatpush.msra.mxu0 0.0
    %843 = vmatpush.msra.mxu0 0.0
    %844 = vmatpush.msra.mxu0 0.0
    %845 = vmatpush.msra.mxu0 0.0
    %846 = vmatpush.msra.mxu0 0.0
    %847 = vmatpush.msra.mxu0 0.0
    %848 = vmatpush.msra.mxu0 %v659
    %849 = vmatpush.msra.mxu0 %v658
    %850 = vmatpush.msra.mxu0 %v657
    %851 = vmatpush.msra.mxu0 %v656
    %852 = vmatmul.f32.gmra.mxu0 %v834
    %v853 = vpop.f32.mrf.mxu0
    %v854 = vadd.f32 0.0, %v853
    %855 = vdwg.mxu0
    %v856 = vadd.f32 %v693, %v854
    %v857 = vxor.u32 %v856, 2147483648
    %v858 = vmul.f32 %v857, 1.442695
    %v859 = vpow.pop %v858
    %v860 = vadd.f32 %v859, 1.0
    %v861 = vrcp.pop %v860
    %v862 = vmul.f32 %v860, %v861
    %v863 = vsub.f32 1.0, %v862
    %v864 = vmul.f32 %v861, %v863
    %v865 = vadd.f32 %v861, %v864
    %vm866 = vweird.f32 %v860
    %vm867 = vweird.f32 %v861
    %vm868 = vmor %vm866, %vm867
    %v869 = vsel %vm868, %v861, %v865
    %v870 = vand.u32 2147483647, %v860
    %vm871 = vcmp.eq.f32.partialorder %v870, 8.507059e+37
    %v872 = vand.u32 %v860, 2147483648
    %v873 = vor.u32 1.1754944e-38, %v872
    %v874 = vsel %vm871, %v873, %v869
    %v875 = vmul.f32 1.0, %v874
    %v876 = vtanh.pop %v856
    %v877 = vmul.f32 %v875, %v824
    %879 = vrot.lane.b32.xlu0 %v876, 64
    %v880 = vpop.permute.xlu0 %879
    %v882 = vmul.f32 %v875, %v880
    %884 = vrot.lane.b32.xlu0 %v882, 32
    %v885 = vpop.permute.xlu0 %884
    %v887 = vadd.f32 %v877, %v885
    %v888 = vtanh.pop %v887
    %890 = vrot.lane.b32.xlu0 %v888, 64
    %v891 = vpop.permute.xlu0 %890
    %v893 = vmul.f32 %v875, %v891
    %895 = vrot.lane.b32.xlu0 %v893, 32
    %v896 = vpop.permute.xlu0 %895
    %v897 = vsel %vm149, %v896, 0
    %899 = vmatpush.msra.mxu0 0.0
    %900 = vmatpush.msra.mxu0 0.0
    %901 = vmatpush.msra.mxu0 0.0
    %902 = vmatpush.msra.mxu0 0.0
    %903 = vmatpush.msra.mxu0 0.0
    %904 = vmatpush.msra.mxu0 0.0
    %905 = vmatpush.msra.mxu0 0.0
    %906 = vmatpush.msra.mxu0 0.0
    %907 = vmatpush.msra.mxu0 0.0
    %908 = vmatpush.msra.mxu0 0.0
    %909 = vmatpush.msra.mxu0 0.0
    %910 = vmatpush.msra.mxu0 0.0
    %911 = vmatpush.msra.mxu0 %v659
    %912 = vmatpush.msra.mxu0 %v658
    %913 = vmatpush.msra.mxu0 %v657
    %914 = vmatpush.msra.mxu0 %v656
    %915 = vmatmul.f32.gmra.mxu0 %v897
    %v916 = vpop.f32.mrf.mxu0
    %v917 = vadd.f32 0.0, %v916
    %918 = vdwg.mxu0
    %v919 = vadd.f32 %v696, %v917
    %v920 = vxor.u32 %v919, 2147483648
    %v921 = vmul.f32 %v920, 1.442695
    %v922 = vpow.pop %v921
    %v923 = vadd.f32 %v922, 1.0
    %v924 = vrcp.pop %v923
    %v925 = vmul.f32 %v923, %v924
    %v926 = vsub.f32 1.0, %v925
    %v927 = vmul.f32 %v924, %v926
    %v928 = vadd.f32 %v924, %v927
    %vm929 = vweird.f32 %v923
    %vm930 = vweird.f32 %v924
    %vm931 = vmor %vm929, %vm930
    %v932 = vsel %vm931, %v924, %v928
    %v933 = vand.u32 2147483647, %v923
    %vm934 = vcmp.eq.f32.partialorder %v933, 8.507059e+37
    %v935 = vand.u32 %v923, 2147483648
    %v936 = vor.u32 1.1754944e-38, %v935
    %v937 = vsel %vm934, %v936, %v932
    %v938 = vmul.f32 1.0, %v937
    %v939 = vtanh.pop %v919
    %v940 = vmul.f32 %v938, %v887
    %942 = vrot.lane.b32.xlu0 %v939, 64
    %v943 = vpop.permute.xlu0 %942
    %v945 = vmul.f32 %v938, %v943
    %947 = vrot.lane.b32.xlu0 %v945, 32
    %v948 = vpop.permute.xlu0 %947
    %v950 = vadd.f32 %v940, %v948
    %v951 = vtanh.pop %v950
    %953 = vrot.lane.b32.xlu0 %v951, 64
    %v954 = vpop.permute.xlu0 %953
    %v956 = vmul.f32 %v938, %v954
    %958 = vrot.lane.b32.xlu0 %v956, 32
    %v959 = vpop.permute.xlu0 %958
    %v960 = vsel %vm149, %v959, 0
    %962 = vmatpush.msra.mxu0 0.0
    %963 = vmatpush.msra.mxu0 0.0
    %964 = vmatpush.msra.mxu0 0.0
    %965 = vmatpush.msra.mxu0 0.0
    %966 = vmatpush.msra.mxu0 0.0
    %967 = vmatpush.msra.mxu0 0.0
    %968 = vmatpush.msra.mxu0 0.0
    %969 = vmatpush.msra.mxu0 0.0
    %970 = vmatpush.msra.mxu0 0.0
    %971 = vmatpush.msra.mxu0 0.0
    %972 = vmatpush.msra.mxu0 0.0
    %973 = vmatpush.msra.mxu0 0.0
    %974 = vmatpush.msra.mxu0 %v659
    %975 = vmatpush.msra.mxu0 %v658
    %976 = vmatpush.msra.mxu0 %v657
    %977 = vmatpush.msra.mxu0 %v656
    %978 = vmatmul.f32.gmra.mxu0 %v960
    %v979 = vpop.f32.mrf.mxu0
    %v980 = vadd.f32 0.0, %v979
    %981 = vdwg.mxu0
    %v982 = vadd.f32 %v699, %v980
    %v983 = vxor.u32 %v982, 2147483648
    %v984 = vmul.f32 %v983, 1.442695
    %v985 = vpow.pop %v984
    %v986 = vadd.f32 %v985, 1.0
    %v987 = vrcp.pop %v986
    %v988 = vmul.f32 %v986, %v987
    %v989 = vsub.f32 1.0, %v988
    %v990 = vmul.f32 %v987, %v989
    %v991 = vadd.f32 %v987, %v990
    %vm992 = vweird.f32 %v986
    %vm993 = vweird.f32 %v987
    %vm994 = vmor %vm992, %vm993
    %v995 = vsel %vm994, %v987, %v991
    %v996 = vand.u32 2147483647, %v986
    %vm997 = vcmp.eq.f32.partialorder %v996, 8.507059e+37
    %v998 = vand.u32 %v986, 2147483648
    %v999 = vor.u32 1.1754944e-38, %v998
    %v1000 = vsel %vm997, %v999, %v995
    %v1001 = vmul.f32 1.0, %v1000
    %v1002 = vtanh.pop %v982
    %v1003 = vmul.f32 %v1001, %v950
    %1005 = vrot.lane.b32.xlu0 %v1002, 64
    %v1006 = vpop.permute.xlu0 %1005
    %v1008 = vmul.f32 %v1001, %v1006
    %1010 = vrot.lane.b32.xlu0 %v1008, 32
    %v1011 = vpop.permute.xlu0 %1010
    %v1013 = vadd.f32 %v1003, %v1011
    %v1014 = vtanh.pop %v1013
    %1016 = vrot.lane.b32.xlu0 %v1014, 64
    %v1017 = vpop.permute.xlu0 %1016
    %v1019 = vmul.f32 %v1001, %v1017
    %1021 = vrot.lane.b32.xlu0 %v1019, 32
    %v1022 = vpop.permute.xlu0 %1021
    %v1023 = vsel %vm149, %v1022, 0
    %1025 = vmatpush.msra.mxu0 0.0
    %1026 = vmatpush.msra.mxu0 0.0
    %1027 = vmatpush.msra.mxu0 0.0
    %1028 = vmatpush.msra.mxu0 0.0
    %1029 = vmatpush.msra.mxu0 0.0
    %1030 = vmatpush.msra.mxu0 0.0
    %1031 = vmatpush.msra.mxu0 0.0
    %1032 = vmatpush.msra.mxu0 0.0
    %1033 = vmatpush.msra.mxu0 0.0
    %1034 = vmatpush.msra.mxu0 0.0
    %1035 = vmatpush.msra.mxu0 0.0
    %1036 = vmatpush.msra.mxu0 0.0
    %1037 = vmatpush.msra.mxu0 %v659
    %1038 = vmatpush.msra.mxu0 %v658
    %1039 = vmatpush.msra.mxu0 %v657
    %1040 = vmatpush.msra.mxu0 %v656
    %1041 = vmatmul.f32.gmra.mxu0 %v1023
    %v1042 = vpop.f32.mrf.mxu0
    %v1043 = vadd.f32 0.0, %v1042
    %1044 = vdwg.mxu0
    %v1045 = vadd.f32 %v702, %v1043
    %v1046 = vxor.u32 %v1045, 2147483648
    %v1047 = vmul.f32 %v1046, 1.442695
    %v1048 = vpow.pop %v1047
    %v1049 = vadd.f32 %v1048, 1.0
    %v1050 = vrcp.pop %v1049
    %v1051 = vmul.f32 %v1049, %v1050
    %v1052 = vsub.f32 1.0, %v1051
    %v1053 = vmul.f32 %v1050, %v1052
    %v1054 = vadd.f32 %v1050, %v1053
    %vm1055 = vweird.f32 %v1049
    %vm1056 = vweird.f32 %v1050
    %vm1057 = vmor %vm1055, %vm1056
    %v1058 = vsel %vm1057, %v1050, %v1054
    %v1059 = vand.u32 2147483647, %v1049
    %vm1060 = vcmp.eq.f32.partialorder %v1059, 8.507059e+37
    %v1061 = vand.u32 %v1049, 2147483648
    %v1062 = vor.u32 1.1754944e-38, %v1061
    %v1063 = vsel %vm1060, %v1062, %v1058
    %v1064 = vmul.f32 1.0, %v1063
    %v1065 = vtanh.pop %v1045
    %v1066 = vmul.f32 %v1064, %v1013
    %1068 = vrot.lane.b32.xlu0 %v1065, 64
    %v1069 = vpop.permute.xlu0 %1068
    %v1071 = vmul.f32 %v1064, %v1069
    %1073 = vrot.lane.b32.xlu0 %v1071, 32
    %v1074 = vpop.permute.xlu0 %1073
    %v1076 = vadd.f32 %v1066, %v1074
    %v1077 = vtanh.pop %v1076
    %1079 = vrot.lane.b32.xlu0 %v1077, 64
    %v1080 = vpop.permute.xlu0 %1079
    %v1082 = vmul.f32 %v1064, %v1080
    %1084 = vrot.lane.b32.xlu0 %v1082, 32
    %v1085 = vpop.permute.xlu0 %1084
    %v1086 = vsel %vm149, %v1085, 0
    %1088 = vmatpush.msra.mxu0 0.0
    %1089 = vmatpush.msra.mxu0 0.0
    %1090 = vmatpush.msra.mxu0 0.0
    %1091 = vmatpush.msra.mxu0 0.0
    %1092 = vmatpush.msra.mxu0 0.0
    %1093 = vmatpush.msra.mxu0 0.0
    %1094 = vmatpush.msra.mxu0 0.0
    %1095 = vmatpush.msra.mxu0 0.0
    %1096 = vmatpush.msra.mxu0 0.0
    %1097 = vmatpush.msra.mxu0 0.0
    %1098 = vmatpush.msra.mxu0 0.0
    %1099 = vmatpush.msra.mxu0 0.0
    %1100 = vmatpush.msra.mxu0 %v659
    %1101 = vmatpush.msra.mxu0 %v658
    %1102 = vmatpush.msra.mxu0 %v657
    %1103 = vmatpush.msra.mxu0 %v656
    %1104 = vmatmul.f32.gmra.mxu0 %v1086
    %v1105 = vpop.f32.mrf.mxu0
    %v1106 = vadd.f32 0.0, %v1105
    %1107 = vdwg.mxu0
    %v1108 = vadd.f32 %v705, %v1106
    %v1109 = vxor.u32 %v1108, 2147483648
    %v1110 = vmul.f32 %v1109, 1.442695
    %v1111 = vpow.pop %v1110
    %v1112 = vadd.f32 %v1111, 1.0
    %v1113 = vrcp.pop %v1112
    %v1114 = vmul.f32 %v1112, %v1113
    %v1115 = vsub.f32 1.0, %v1114
    %v1116 = vmul.f32 %v1113, %v1115
    %v1117 = vadd.f32 %v1113, %v1116
    %vm1118 = vweird.f32 %v1112
    %vm1119 = vweird.f32 %v1113
    %vm1120 = vmor %vm1118, %vm1119
    %v1121 = vsel %vm1120, %v1113, %v1117
    %v1122 = vand.u32 2147483647, %v1112
    %vm1123 = vcmp.eq.f32.partialorder %v1122, 8.507059e+37
    %v1124 = vand.u32 %v1112, 2147483648
    %v1125 = vor.u32 1.1754944e-38, %v1124
    %v1126 = vsel %vm1123, %v1125, %v1121
    %v1127 = vmul.f32 1.0, %v1126
    %v1128 = vtanh.pop %v1108
    %v1129 = vmul.f32 %v1127, %v1076
    %1131 = vrot.lane.b32.xlu0 %v1128, 64
    %v1132 = vpop.permute.xlu0 %1131
    %v1134 = vmul.f32 %v1127, %v1132
    %1136 = vrot.lane.b32.xlu0 %v1134, 32
    %v1137 = vpop.permute.xlu0 %1136
    %v1139 = vadd.f32 %v1129, %v1137
    %v1140 = vtanh.pop %v1139
    %1142 = vrot.lane.b32.xlu0 %v1140, 64
    %v1143 = vpop.permute.xlu0 %1142
    %v1145 = vmul.f32 %v1127, %v1143
    %1147 = vrot.lane.b32.xlu0 %v1145, 32
    %v1148 = vpop.permute.xlu0 %1147
    %v1149 = vsel %vm149, %v1148, 0
    %1151 = vmatpush.msra.mxu0 0.0
    %1152 = vmatpush.msra.mxu0 0.0
    %1153 = vmatpush.msra.mxu0 0.0
    %1154 = vmatpush.msra.mxu0 0.0
    %1155 = vmatpush.msra.mxu0 0.0
    %1156 = vmatpush.msra.mxu0 0.0
    %1157 = vmatpush.msra.mxu0 0.0
    %1158 = vmatpush.msra.mxu0 0.0
    %1159 = vmatpush.msra.mxu0 0.0
    %1160 = vmatpush.msra.mxu0 0.0
    %1161 = vmatpush.msra.mxu0 0.0
    %1162 = vmatpush.msra.mxu0 0.0
    %1163 = vmatpush.msra.mxu0 %v659
    %1164 = vmatpush.msra.mxu0 %v658
    %1165 = vmatpush.msra.mxu0 %v657
    %1166 = vmatpush.msra.mxu0 %v656
    %1167 = vmatmul.f32.gmra.mxu0 %v1149
    %v1168 = vpop.f32.mrf.mxu0
    %v1169 = vadd.f32 0.0, %v1168
    %1170 = vdwg.mxu0
    %v1171 = vadd.f32 %v708, %v1169
    %v1172 = vxor.u32 %v1171, 2147483648
    %v1173 = vmul.f32 %v1172, 1.442695
    %v1174 = vpow.pop %v1173
    %v1175 = vadd.f32 %v1174, 1.0
    %v1176 = vrcp.pop %v1175
    %v1177 = vmul.f32 %v1175, %v1176
    %v1178 = vsub.f32 1.0, %v1177
    %v1179 = vmul.f32 %v1176, %v1178
    %v1180 = vadd.f32 %v1176, %v1179
    %vm1181 = vweird.f32 %v1175
    %vm1182 = vweird.f32 %v1176
    %vm1183 = vmor %vm1181, %vm1182
    %v1184 = vsel %vm1183, %v1176, %v1180
    %v1185 = vand.u32 2147483647, %v1175
    %vm1186 = vcmp.eq.f32.partialorder %v1185, 8.507059e+37
    %v1187 = vand.u32 %v1175, 2147483648
    %v1188 = vor.u32 1.1754944e-38, %v1187
    %v1189 = vsel %vm1186, %v1188, %v1184
    %v1190 = vmul.f32 1.0, %v1189
    %v1191 = vtanh.pop %v1171
    %v1192 = vmul.f32 %v1190, %v1139
    %1194 = vrot.lane.b32.xlu0 %v1191, 64
    %v1195 = vpop.permute.xlu0 %1194
    %v1197 = vmul.f32 %v1190, %v1195
    %1199 = vrot.lane.b32.xlu0 %v1197, 32
    %v1200 = vpop.permute.xlu0 %1199
    %v1202 = vadd.f32 %v1192, %v1200
    %v1203 = vtanh.pop %v1202
    %1205 = vrot.lane.b32.xlu0 %v1203, 64
    %v1206 = vpop.permute.xlu0 %1205
    %v1208 = vmul.f32 %v1190, %v1206
    %v1209 = vld [vmem:[#allocation5] sm:$0xff]
    %v1210 = vld [vmem:[#allocation5 + $0x8] sm:$0xff]
    %v1211 = vld [vmem:[#allocation5 + $0x10] sm:$0xff]
    %v1212 = vld [vmem:[#allocation5 + $0x18] sm:$0xff]
    %v1213 = vld [vmem:[%s8] sm:$0x1]
    %v1215 = vperm.slane %v1213, 0
    %1218 = vrot.lane.b32.xlu0 %v1208, 32
    %v1219 = vpop.permute.xlu0 %1218
    %v1220 = vsel %vm149, %v1219, 0
    %1222 = vmatpush.msra.mxu0 0.0
    %1223 = vmatpush.msra.mxu0 0.0
    %1224 = vmatpush.msra.mxu0 0.0
    %1225 = vmatpush.msra.mxu0 0.0
    %1226 = vmatpush.msra.mxu0 0.0
    %1227 = vmatpush.msra.mxu0 0.0
    %1228 = vmatpush.msra.mxu0 0.0
    %1229 = vmatpush.msra.mxu0 0.0
    %1230 = vmatpush.msra.mxu0 0.0
    %1231 = vmatpush.msra.mxu0 0.0
    %1232 = vmatpush.msra.mxu0 0.0
    %1233 = vmatpush.msra.mxu0 0.0
    %1234 = vmatpush.msra.mxu0 %v1212
    %1235 = vmatpush.msra.mxu0 %v1211
    %1236 = vmatpush.msra.mxu0 %v1210
    %1237 = vmatpush.msra.mxu0 %v1209
    %1238 = vmatmul.f32.gmra.mxu0 %v1220
    %v1239 = vpop.f32.mrf.mxu0
    %v1240 = vadd.f32 %v1215, %v1239
    %1241 = vdwg.mxu0
    %1242 = vst [vmem:[#allocation7] sm:$0xff] %v1240
    // Predicated region
    $region46: #{tpu_custom_call.1} parent=1 // pred_check
      _
    $region47: #{tpu_custom_call.1} parent=1 // pred_check_branch
      %1244 = sbr.rel (0) target = $region49
    $region48: #{tpu_custom_call.1} parent=1 // pred_region
      %1246 = vsyncadd [#allocation4], 0
      %s1248 = sshll.u32 [#allocation7], 4
      %s1249 = int_to_ptr.vmem [resolvable:$true] %s1248
      %s1250 = sshll.u32 %s9, 4
      %s1251 = int_to_ptr.hbm [resolvable:$true] %s1250
      %1253 = dma.vmem_to_hbm [thread:$0]  %s1249, 128, %s1251, [#allocation4]
    $region49: #{tpu_custom_call.1} parent=1 // pred_fallthru
      _
    // Predicated region
    $region50: #{tpu_custom_call.1} parent=1 // pred_check
      _
    $region51: #{tpu_custom_call.1} parent=1 // pred_check_branch
      %1255 = sbr.rel (0) target = $region53
    $region52: #{tpu_custom_call.1} parent=1 // pred_region
      %1257 = dma.done [#allocation4], 128
    $region53: #{tpu_custom_call.1} parent=1 // pred_fallthru
      _
    %1258 = vsyncpa [#allocation3], 1
    %1259 = vsyncpa [#allocation6], 1
    %1260 = vsyncpa [#allocation4], 1

</llo_original>
